<compile_context>
chip_gen: v5e
topology: v5e:2x2
jax: 0.10.0
libtpu: 0.0.40
codegen_flags: <defaults>
</compile_context>

<pallas_src>
import jax
import jax.numpy as jnp
from jax.experimental import pallas as pl
from jax.experimental.pallas import tpu as pltpu

NDF = 64
C_IN = NDF * 8                  # 512
H = W = 4                       # spatial size implied by the 4x4 VALID conv -> 1x1 output
HID = 128                       # hidden channels after first conv
K = C_IN * H * W                # 8192 flattened contraction dim
N_DISC = 10
N_CONT = 2
N_HEADS = N_DISC + 2 * N_CONT   # 14 useful output columns (disc | mu | var)
HEADS_PAD = 16                  # sublane-padded head count (bf16 sublane packing)


def q_kernel(x_ref, w_ref, b_ref, out_ref):
    # activations cast to bf16 in-kernel (review item 2); f32 MXU accumulation.
    xb = x_ref[...].astype(jnp.bfloat16)                      # (B, K)
    # z = x @ W_fused^T + b : contract dim 1 of both operands (trans_b form),
    # so the (16, 8192) weight is consumed in its HBM layout.
    z = jax.lax.dot_general(
        xb, w_ref[...],
        dimension_numbers=(((1,), (1,)), ((), ())),
        preferred_element_type=jnp.float32,
    )                                                          # (B, HEADS_PAD)
    z = z + b_ref[...]
    # exp() only on the var columns [N_DISC + N_CONT, N_HEADS); rest passthrough.
    col = jax.lax.broadcasted_iota(jnp.int32, z.shape, 1)
    is_var = (col >= N_DISC + N_CONT) & (col < N_HEADS)
    out_ref[...] = jnp.where(is_var, jnp.exp(z), z)


def q_forward(x_nchw, fused_params):
    w_t, b_fused = fused_params                                # (16, K) bf16, (1, 16) f32
    B = x_nchw.shape[0]
    # flatten NCHW -> (B, C*H*W), matching PyTorch Conv2d (O, C, kH, kW) flattening.
    # Kept in f32; the bf16 cast happens inside the kernel.
    xf = x_nchw.reshape(B, K)

    cost = pl.CostEstimate(
        flops=2 * B * K * N_HEADS,
        transcendentals=B * N_CONT,
        bytes_accessed=(HEADS_PAD * K * 2      # bf16 fused weight
                        + B * K * 4            # f32 activations
                        + HEADS_PAD * 4        # f32 bias
                        + B * HEADS_PAD * 4),  # f32 output
    )

    out = pl.pallas_call(
        q_kernel,
        out_shape=jax.ShapeDtypeStruct((B, HEADS_PAD), jnp.float32),
        grid=(1,),
        in_specs=[
            pl.BlockSpec((B, K), lambda i: (0, 0)),            # activations (f32)
            pl.BlockSpec((HEADS_PAD, K), lambda i: (0, 0)),    # fused weight^T (bf16)
            pl.BlockSpec((1, HEADS_PAD), lambda i: (0, 0)),    # fused bias (f32)
        ],
        out_specs=pl.BlockSpec((B, HEADS_PAD), lambda i: (0, 0)),
        compiler_params=pltpu.CompilerParams(
            dimension_semantics=("arbitrary",),
        ),
        cost_estimate=cost,
    )(xf, w_t, b_fused)

    disc = out[:, :N_DISC]
    mu = out[:, N_DISC:N_DISC + N_CONT]
    var = out[:, N_DISC + N_CONT:N_HEADS]
    return disc, mu, var


def init_params(key):
    ks = jax.random.split(key, 7)
    # conv:      Conv2d(512, 128, 4, 1, 0, bias=False) -> weight (128, 512, 4, 4)
    w_conv = jax.random.normal(ks[0], (HID, C_IN, H, W), jnp.float32) * 0.02
    # conv_disc: Conv2d(128, 10, 1) -> weight (10, 128, 1, 1), bias (10,)
    w_disc = jax.random.normal(ks[1], (N_DISC, HID, 1, 1), jnp.float32) * 0.05
    b_disc = jax.random.normal(ks[2], (N_DISC,), jnp.float32) * 0.01
    # conv_mu:   Conv2d(128, 2, 1)
    w_mu = jax.random.normal(ks[3], (N_CONT, HID, 1, 1), jnp.float32) * 0.05
    b_mu = jax.random.normal(ks[4], (N_CONT,), jnp.float32) * 0.01
    # conv_var:  Conv2d(128, 2, 1)
    w_var = jax.random.normal(ks[5], (N_CONT, HID, 1, 1), jnp.float32) * 0.05
    b_var = jax.random.normal(ks[6], (N_CONT,), jnp.float32) * 0.01

    # ---- raw matmul-form params (f32, two-stage) used only by the reference ----
    w1 = w_conv.reshape(HID, K).T                     # (K, 128)
    wd = w_disc.reshape(N_DISC, HID).T                # (128, 10)
    wm = w_mu.reshape(N_CONT, HID).T                  # (128, 2)
    wv = w_var.reshape(N_CONT, HID).T                 # (128, 2)
    raw = (w1, wd, b_disc, wm, b_mu, wv, b_var)

    # ---- offline head folding:  x @ w1 @ heads == x @ (w1 @ heads)  (exact) ----
    heads = jnp.concatenate([wd, wm, wv], axis=1)     # (128, 14)
    w_fused = w1 @ heads                              # (K, 14) in f32
    # store TRANSPOSED, heads on the sublane axis, padded 14 -> 16, bf16:
    w_t = jnp.pad(w_fused.T, ((0, HEADS_PAD - N_HEADS), (0, 0)))   # (16, K)
    w_t = w_t.astype(jnp.bfloat16)

    b_fused = jnp.concatenate([b_disc, b_mu, b_var])  # (14,)
    b_fused = jnp.pad(b_fused, (0, HEADS_PAD - N_HEADS)).reshape(1, HEADS_PAD)  # f32

    return (w_t, b_fused), raw


def q_reference_fused(x_nchw, fused_params):
    """Same math / same precision as the kernel (bf16 operands, f32 accumulate)."""
    w_t, b_fused = fused_params
    B = x_nchw.shape[0]
    xb = x_nchw.reshape(B, K).astype(jnp.bfloat16)
    z = jax.lax.dot_general(xb, w_t, (((1,), (1,)), ((), ())),
                            preferred_element_type=jnp.float32) + b_fused
    return (z[:, :N_DISC],
            z[:, N_DISC:N_DISC + N_CONT],
            jnp.exp(z[:, N_DISC + N_CONT:N_HEADS]))


def q_reference_f32(x_nchw, raw_params):
    """Two-stage f32 reference matching the PyTorch forward() semantics."""
    w1, wd, bd, wm, bm, wv, bv = raw_params
    xf = x_nchw.reshape(x_nchw.shape[0], K)
    y = xf @ w1
    return y @ wd + bd, y @ wm + bm, jnp.exp(y @ wv + bv)


if __name__ == "__main__":
    key = jax.random.PRNGKey(0)
    k_x, k_p = jax.random.split(key)

    B = 2
    x = jax.random.normal(k_x, (B, C_IN, H, W), jnp.float32)
    fused_params, raw_params = init_params(k_p)

    disc, mu, var = q_forward(x, fused_params)
    jax.block_until_ready((disc, mu, var))

    assert disc.shape == (B, N_DISC) and mu.shape == (B, N_CONT) and var.shape == (B, N_CONT)

    # exact-precision check: same fused bf16 math outside Pallas
    d_f, m_f, v_f = q_reference_fused(x, fused_params)
    assert jnp.allclose(disc, d_f, atol=1e-3, rtol=1e-3)
    assert jnp.allclose(mu, m_f, atol=1e-3, rtol=1e-3)
    assert jnp.allclose(var, v_f, atol=1e-3, rtol=1e-3)

    # semantic check vs. original two-stage f32 forward (loose tolerance only for
    # bf16 weight/activation storage rounding; the head fold itself is exact)
    d_r, m_r, v_r = q_reference_f32(x, raw_params)
    assert jnp.allclose(disc, d_r, atol=5e-2, rtol=5e-2)
    assert jnp.allclose(mu, m_r, atol=5e-2, rtol=5e-2)
    assert jnp.allclose(var, v_r, atol=5e-2, rtol=5e-2)

    print("KERNEL_OK")
</pallas_src>

<mosaic_0001>
module attributes {stable_mosaic.version = 11 : i64} {
  func.func @q_kernel(%arg0: i32, %arg1: memref<2x8192xf32, #tpu.memory_space<vmem>>, %arg2: memref<16x8192xbf16, #tpu.memory_space<vmem>>, %arg3: memref<1x16xf32, #tpu.memory_space<vmem>>, %arg4: memref<2x16xf32, #tpu.memory_space<vmem>>) attributes {dimension_semantics = [#tpu.dimension_semantics<arbitrary>], iteration_bounds = array<i64: 1>, scalar_prefetch = 0 : i64, scratch_operands = 0 : i64, tpu.core_type = #tpu.core_type<tc>, window_params = [{pipeline_mode = #tpu.pipeline_mode<synchronous>, transform_indices = @transform_0, window_bounds = array<i64: 2, 8192>}, {pipeline_mode = #tpu.pipeline_mode<synchronous>, transform_indices = @transform_1, window_bounds = array<i64: 16, 8192>}, {pipeline_mode = #tpu.pipeline_mode<synchronous>, transform_indices = @transform_2, window_bounds = array<i64: 1, 16>}, {pipeline_mode = #tpu.pipeline_mode<synchronous>, transform_indices = @transform_3, window_bounds = array<i64: 2, 16>}]} {
    %c0 = arith.constant 0 : index
    %c0_0 = arith.constant 0 : index
    %0 = vector.load %arg1[%c0, %c0_0] : memref<2x8192xf32, #tpu.memory_space<vmem>>, vector<2x8192xf32>
    %1 = arith.truncf %0 : vector<2x8192xf32> to vector<2x8192xbf16>
    %c0_1 = arith.constant 0 : index
    %c0_2 = arith.constant 0 : index
    %2 = vector.load %arg2[%c0_1, %c0_2] : memref<16x8192xbf16, #tpu.memory_space<vmem>>, vector<16x8192xbf16>
    %cst = arith.constant dense<0.000000e+00> : vector<2x16xf32>
    %3 = tpu.matmul %1, %2, %cst {dimension_numbers = #tpu.dot_dimension_numbers<[1], [1], [0], [0], [0, 0, 1, 0], [], []>} : vector<2x8192xbf16>, vector<16x8192xbf16>, vector<2x16xf32> -> vector<2x16xf32>
    %c0_3 = arith.constant 0 : index
    %c0_4 = arith.constant 0 : index
    %4 = vector.load %arg3[%c0_3, %c0_4] : memref<1x16xf32, #tpu.memory_space<vmem>>, vector<1x16xf32>
    %5 = vector.broadcast %4 : vector<1x16xf32> to vector<2x16xf32>
    %6 = arith.addf %3, %5 : vector<2x16xf32>
    %7 = tpu.iota {dimensions = array<i32: 1>} : vector<2x16xi32>
    %c12_i32 = arith.constant 12 : i32
    %8 = vector.broadcast %c12_i32 : i32 to vector<2x16xi32>
    %9 = arith.cmpi sge, %7, %8 : vector<2x16xi32>
    %c14_i32 = arith.constant 14 : i32
    %10 = vector.broadcast %c14_i32 : i32 to vector<2x16xi32>
    %11 = arith.cmpi slt, %7, %10 : vector<2x16xi32>
    %12 = arith.andi %9, %11 : vector<2x16xi1>
    %13 = math.exp %6 : vector<2x16xf32>
    %14 = arith.select %12, %13, %6 : vector<2x16xi1>, vector<2x16xf32>
    %c0_5 = arith.constant 0 : index
    %c0_6 = arith.constant 0 : index
    %15 = vector.load %arg4[%c0_5, %c0_6] : memref<2x16xf32, #tpu.memory_space<vmem>>, vector<2x16xf32>
    tpu.vector_store %arg4[%c0_5, %c0_6], %14 {strides = array<i32>} : memref<2x16xf32, #tpu.memory_space<vmem>>, vector<2x16xf32>,
    return
  }
  func.func @transform_0(%arg0: i32) -> (i32, i32) {
    %c0_i32 = arith.constant 0 : i32
    %c0_i32_0 = arith.constant 0 : i32
    %c0_i32_1 = arith.constant 0 : i32
    return %c0_i32, %c0_i32_0 : i32, i32
  }
  func.func @transform_1(%arg0: i32) -> (i32, i32) {
    %c0_i32 = arith.constant 0 : i32
    %c0_i32_0 = arith.constant 0 : i32
    %c0_i32_1 = arith.constant 0 : i32
    return %c0_i32, %c0_i32_0 : i32, i32
  }
  func.func @transform_2(%arg0: i32) -> (i32, i32) {
    %c0_i32 = arith.constant 0 : i32
    %c0_i32_0 = arith.constant 0 : i32
    %c0_i32_1 = arith.constant 0 : i32
    return %c0_i32, %c0_i32_0 : i32, i32
  }
  func.func @transform_3(%arg0: i32) -> (i32, i32) {
    %c0_i32 = arith.constant 0 : i32
    %c0_i32_0 = arith.constant 0 : i32
    %c0_i32_1 = arith.constant 0 : i32
    return %c0_i32, %c0_i32_0 : i32, i32
  }
}

</mosaic_0001>

<llo_original>
// kernel: tpu_custom_call.1
$region0: #{tpu_custom_call.1}
  #allocation0 [shape = 'u32[]', space=smem, size = 0x4, offset = 0x4, fixed_abs, tag = 'smem constant byte address 0x4 - core index']
  #allocation1 [shape = 'u32[72,128]{1,0:T(1,128)}', space=vmem, size = 0x9000, scoped, tag = 'internal scratch']
  %s0 = inlined_call_operand.hbm [shape: f32[2,8192], index: 0, kind: input, shape index: {}]
  %s1 = inlined_call_operand.hbm [shape: bf16[16,8192], index: 1, kind: input, shape index: {}]
  %s2 = inlined_call_operand.vmem [shape: f32[1,16], index: 2, kind: input, shape index: {}]
  %s3 = inlined_call_operand.hbm [shape: f32[2,16], index: 3, kind: output, shape index: {}]
  %s4 = sld [smem:[#allocation0]]
  $region30: #{tpu_custom_call.1} parent=0
    _
  %s6 = ssub.s32 1, %s4
  %s7 = scalar_select 0, %s6, %s4
  $region1: #{tpu_custom_call.1} parent=0
    #allocation2 [shape = 'u8[65536]{0}', space=vmem, size = 0x10000, scoped, tag = 'input window, operand 0, single buffered']
    #allocation3 [shape = 's32[1]{0}', space=sflag, size = 0x4, scoped, tag = 'scoped memory for tpu_custom_call.1']
    #allocation4 [shape = 's32[1]{0}', space=sflag, size = 0x4, scoped, tag = 'scoped memory for tpu_custom_call.1']
    #allocation5 [shape = 'u8[262144]{0}', space=vmem, size = 0x40000, scoped, tag = 'input window, operand 1, single buffered']
    #allocation6 [shape = 's32[1]{0}', space=sflag, size = 0x4, scoped, tag = 'scoped memory for tpu_custom_call.1']
    #allocation7 [shape = 'u8[1024]{0}', space=vmem, size = 0x400, scoped, tag = 'output window, operand 0, single buffered']
    %8 = vsyncpa [#allocation3], 0
    %9 = vsyncpa [#allocation6], 0
    %10 = vsyncpa [#allocation4], 0
    // Predicated region
    $region2: #{tpu_custom_call.1} parent=1 // pred_check
      _
    $region3: #{tpu_custom_call.1} parent=1 // pred_check_branch
      %12 = sbr.rel (0) target = $region5
    $region4: #{tpu_custom_call.1} parent=1 // pred_region
      %14 = vsyncadd [#allocation3], 0
      %s16 = sshll.u32 %s0, 4
      %s17 = int_to_ptr.hbm [resolvable:$true] %s16
      %s18 = sshll.u32 [#allocation2], 4
      %s19 = int_to_ptr.vmem [resolvable:$true] %s18
      %21 = dma.hbm_to_vmem [thread:$0]  %s17, 2048, %s19, [#allocation3]
    $region5: #{tpu_custom_call.1} parent=1 // pred_fallthru
      _
    // Predicated region
    $region6: #{tpu_custom_call.1} parent=1 // pred_check
      _
    $region7: #{tpu_custom_call.1} parent=1 // pred_check_branch
      %23 = sbr.rel (0) target = $region9
    $region8: #{tpu_custom_call.1} parent=1 // pred_region
      %25 = vsyncadd [#allocation6], 0
      %s26 = sshll.u32 %s1, 4
      %s27 = int_to_ptr.hbm [resolvable:$true] %s26
      %s28 = sshll.u32 [#allocation5], 4
      %s29 = int_to_ptr.vmem [resolvable:$true] %s28
      %34 = dma.hbm_to_vmem [thread:$0]  %s27, 8192, %s29, [#allocation6], 4096, 4096, 256
    $region9: #{tpu_custom_call.1} parent=1 // pred_fallthru
      _
    // Predicated region
    $region10: #{tpu_custom_call.1} parent=1 // pred_check
      _
    $region11: #{tpu_custom_call.1} parent=1 // pred_check_branch
      %36 = sbr.rel (0) target = $region13
    $region12: #{tpu_custom_call.1} parent=1 // pred_region
      _
    $region13: #{tpu_custom_call.1} parent=1 // pred_fallthru
      _
    // Predicated region
    $region14: #{tpu_custom_call.1} parent=1 // pred_check
      _
    $region15: #{tpu_custom_call.1} parent=1 // pred_check_branch
      %38 = sbr.rel (0) target = $region17
    $region16: #{tpu_custom_call.1} parent=1 // pred_region
      %40 = dma.done [#allocation3], 2048
    $region17: #{tpu_custom_call.1} parent=1 // pred_fallthru
      _
    // Predicated region
    $region18: #{tpu_custom_call.1} parent=1 // pred_check
      _
    $region19: #{tpu_custom_call.1} parent=1 // pred_check_branch
      %42 = sbr.rel (0) target = $region21
    $region20: #{tpu_custom_call.1} parent=1 // pred_region
      %44 = dma.done [#allocation6], 8192
    $region21: #{tpu_custom_call.1} parent=1 // pred_fallthru
      _
    %v46 = vld [vmem:[#allocation2] sm:$0xff]
    %v47 = vld [vmem:[#allocation2 + $0x8] sm:$0xff]
    %v48 = vld [vmem:[#allocation2 + $0x10] sm:$0xff]
    %v49 = vld [vmem:[#allocation2 + $0x18] sm:$0xff]
    %v50 = vld [vmem:[#allocation2 + $0x20] sm:$0xff]
    %v51 = vld [vmem:[#allocation2 + $0x28] sm:$0xff]
    %v52 = vld [vmem:[#allocation2 + $0x30] sm:$0xff]
    %v53 = vld [vmem:[#allocation2 + $0x38] sm:$0xff]
    %v54 = vld [vmem:[#allocation2 + $0x40] sm:$0xff]
    %v55 = vld [vmem:[#allocation2 + $0x48] sm:$0xff]
    %v56 = vld [vmem:[#allocation2 + $0x50] sm:$0xff]
    %v57 = vld [vmem:[#allocation2 + $0x58] sm:$0xff]
    %v58 = vld [vmem:[#allocation2 + $0x60] sm:$0xff]
    %v59 = vld [vmem:[#allocation2 + $0x68] sm:$0xff]
    %v60 = vld [vmem:[#allocation2 + $0x70] sm:$0xff]
    %v61 = vld [vmem:[#allocation2 + $0x78] sm:$0xff]
    %78 = vst [vmem:[#allocation1] ss:$4 sm:$0xff] %v46
    %s79 = scalar_lea.vmem [#allocation1], 32
    %80 = vst [vmem:[%s79] ss:$4 sm:$0xff] %v47
    %v81 = vld.sshfl [vmem:[#allocation1] sm:$0xff pattern:$0x73625140]
    %v82 = vld.sshfl [vmem:[#allocation1 + $0x8] sm:$0xff pattern:$0x73625140]
    %v83 = vld.sshfl [vmem:[#allocation1 + $0x10] sm:$0xff pattern:$0x73625140]
    %v84 = vld.sshfl [vmem:[#allocation1 + $0x18] sm:$0xff pattern:$0x73625140]
    %v85 = vld.sshfl [vmem:[#allocation1 + $0x20] sm:$0xff pattern:$0x73625140]
    %v86 = vld.sshfl [vmem:[#allocation1 + $0x28] sm:$0xff pattern:$0x73625140]
    %v87 = vld.sshfl [vmem:[#allocation1 + $0x30] sm:$0xff pattern:$0x73625140]
    %v88 = vld.sshfl [vmem:[#allocation1 + $0x38] sm:$0xff pattern:$0x73625140]
    %89 = vst [vmem:[#allocation1] ss:$4 sm:$0xff] %v48
    %90 = vst [vmem:[%s79] ss:$4 sm:$0xff] %v49
    %v91 = vld.sshfl [vmem:[#allocation1] sm:$0xff pattern:$0x73625140]
    %v92 = vld.sshfl [vmem:[#allocation1 + $0x8] sm:$0xff pattern:$0x73625140]
    %v93 = vld.sshfl [vmem:[#allocation1 + $0x10] sm:$0xff pattern:$0x73625140]
    %v94 = vld.sshfl [vmem:[#allocation1 + $0x18] sm:$0xff pattern:$0x73625140]
    %v95 = vld.sshfl [vmem:[#allocation1 + $0x20] sm:$0xff pattern:$0x73625140]
    %v96 = vld.sshfl [vmem:[#allocation1 + $0x28] sm:$0xff pattern:$0x73625140]
    %v97 = vld.sshfl [vmem:[#allocation1 + $0x30] sm:$0xff pattern:$0x73625140]
    %v98 = vld.sshfl [vmem:[#allocation1 + $0x38] sm:$0xff pattern:$0x73625140]
    %99 = vst [vmem:[#allocation1] ss:$4 sm:$0xff] %v50
    %100 = vst [vmem:[%s79] ss:$4 sm:$0xff] %v51
    %v101 = vld.sshfl [vmem:[#allocation1] sm:$0xff pattern:$0x73625140]
    %v102 = vld.sshfl [vmem:[#allocation1 + $0x8] sm:$0xff pattern:$0x73625140]
    %v103 = vld.sshfl [vmem:[#allocation1 + $0x10] sm:$0xff pattern:$0x73625140]
    %v104 = vld.sshfl [vmem:[#allocation1 + $0x18] sm:$0xff pattern:$0x73625140]
    %v105 = vld.sshfl [vmem:[#allocation1 + $0x20] sm:$0xff pattern:$0x73625140]
    %v106 = vld.sshfl [vmem:[#allocation1 + $0x28] sm:$0xff pattern:$0x73625140]
    %v107 = vld.sshfl [vmem:[#allocation1 + $0x30] sm:$0xff pattern:$0x73625140]
    %v108 = vld.sshfl [vmem:[#allocation1 + $0x38] sm:$0xff pattern:$0x73625140]
    %109 = vst [vmem:[#allocation1] ss:$4 sm:$0xff] %v52
    %110 = vst [vmem:[%s79] ss:$4 sm:$0xff] %v53
    %v111 = vld.sshfl [vmem:[#allocation1] sm:$0xff pattern:$0x73625140]
    %v112 = vld.sshfl [vmem:[#allocation1 + $0x8] sm:$0xff pattern:$0x73625140]
    %v113 = vld.sshfl [vmem:[#allocation1 + $0x10] sm:$0xff pattern:$0x73625140]
    %v114 = vld.sshfl [vmem:[#allocation1 + $0x18] sm:$0xff pattern:$0x73625140]
    %v115 = vld.sshfl [vmem:[#allocation1 + $0x20] sm:$0xff pattern:$0x73625140]
    %v116 = vld.sshfl [vmem:[#allocation1 + $0x28] sm:$0xff pattern:$0x73625140]
    %v117 = vld.sshfl [vmem:[#allocation1 + $0x30] sm:$0xff pattern:$0x73625140]
    %v118 = vld.sshfl [vmem:[#allocation1 + $0x38] sm:$0xff pattern:$0x73625140]
    %119 = vst [vmem:[#allocation1] ss:$4 sm:$0xff] %v54
    %120 = vst [vmem:[%s79] ss:$4 sm:$0xff] %v55
    %v121 = vld.sshfl [vmem:[#allocation1] sm:$0xff pattern:$0x73625140]
    %v122 = vld.sshfl [vmem:[#allocation1 + $0x8] sm:$0xff pattern:$0x73625140]
    %v123 = vld.sshfl [vmem:[#allocation1 + $0x10] sm:$0xff pattern:$0x73625140]
    %v124 = vld.sshfl [vmem:[#allocation1 + $0x18] sm:$0xff pattern:$0x73625140]
    %v125 = vld.sshfl [vmem:[#allocation1 + $0x20] sm:$0xff pattern:$0x73625140]
    %v126 = vld.sshfl [vmem:[#allocation1 + $0x28] sm:$0xff pattern:$0x73625140]
    %v127 = vld.sshfl [vmem:[#allocation1 + $0x30] sm:$0xff pattern:$0x73625140]
    %v128 = vld.sshfl [vmem:[#allocation1 + $0x38] sm:$0xff pattern:$0x73625140]
    %129 = vst [vmem:[#allocation1] ss:$4 sm:$0xff] %v56
    %130 = vst [vmem:[%s79] ss:$4 sm:$0xff] %v57
    %v131 = vld.sshfl [vmem:[#allocation1] sm:$0xff pattern:$0x73625140]
    %v132 = vld.sshfl [vmem:[#allocation1 + $0x8] sm:$0xff pattern:$0x73625140]
    %v133 = vld.sshfl [vmem:[#allocation1 + $0x10] sm:$0xff pattern:$0x73625140]
    %v134 = vld.sshfl [vmem:[#allocation1 + $0x18] sm:$0xff pattern:$0x73625140]
    %v135 = vld.sshfl [vmem:[#allocation1 + $0x20] sm:$0xff pattern:$0x73625140]
    %v136 = vld.sshfl [vmem:[#allocation1 + $0x28] sm:$0xff pattern:$0x73625140]
    %v137 = vld.sshfl [vmem:[#allocation1 + $0x30] sm:$0xff pattern:$0x73625140]
    %v138 = vld.sshfl [vmem:[#allocation1 + $0x38] sm:$0xff pattern:$0x73625140]
    %139 = vst [vmem:[#allocation1] ss:$4 sm:$0xff] %v58
    %140 = vst [vmem:[%s79] ss:$4 sm:$0xff] %v59
    %v141 = vld.sshfl [vmem:[#allocation1] sm:$0xff pattern:$0x73625140]
    %v142 = vld.sshfl [vmem:[#allocation1 + $0x8] sm:$0xff pattern:$0x73625140]
    %v143 = vld.sshfl [vmem:[#allocation1 + $0x10] sm:$0xff pattern:$0x73625140]
    %v144 = vld.sshfl [vmem:[#allocation1 + $0x18] sm:$0xff pattern:$0x73625140]
    %v145 = vld.sshfl [vmem:[#allocation1 + $0x20] sm:$0xff pattern:$0x73625140]
    %v146 = vld.sshfl [vmem:[#allocation1 + $0x28] sm:$0xff pattern:$0x73625140]
    %v147 = vld.sshfl [vmem:[#allocation1 + $0x30] sm:$0xff pattern:$0x73625140]
    %v148 = vld.sshfl [vmem:[#allocation1 + $0x38] sm:$0xff pattern:$0x73625140]
    %149 = vst [vmem:[#allocation1] ss:$4 sm:$0xff] %v60
    %150 = vst [vmem:[%s79] ss:$4 sm:$0xff] %v61
    %v151 = vld.sshfl [vmem:[#allocation1] sm:$0xff pattern:$0x73625140]
    %v152 = vld.sshfl [vmem:[#allocation1 + $0x8] sm:$0xff pattern:$0x73625140]
    %v153 = vld.sshfl [vmem:[#allocation1 + $0x10] sm:$0xff pattern:$0x73625140]
    %v154 = vld.sshfl [vmem:[#allocation1 + $0x18] sm:$0xff pattern:$0x73625140]
    %v155 = vld.sshfl [vmem:[#allocation1 + $0x20] sm:$0xff pattern:$0x73625140]
    %v156 = vld.sshfl [vmem:[#allocation1 + $0x28] sm:$0xff pattern:$0x73625140]
    %v157 = vld.sshfl [vmem:[#allocation1 + $0x30] sm:$0xff pattern:$0x73625140]
    %v158 = vld.sshfl [vmem:[#allocation1 + $0x38] sm:$0xff pattern:$0x73625140]
    %v223 = vpack.c.bf16 %v81, %v81
    %v224 = vpack.c.bf16 %v82, %v82
    %v225 = vpack.c.bf16 %v83, %v83
    %v226 = vpack.c.bf16 %v84, %v84
    %v227 = vpack.c.bf16 %v85, %v85
    %v228 = vpack.c.bf16 %v86, %v86
    %v229 = vpack.c.bf16 %v87, %v87
    %v230 = vpack.c.bf16 %v88, %v88
    %v231 = vpack.c.bf16 %v91, %v91
    %v232 = vpack.c.bf16 %v92, %v92
    %v233 = vpack.c.bf16 %v93, %v93
    %v234 = vpack.c.bf16 %v94, %v94
    %v235 = vpack.c.bf16 %v95, %v95
    %v236 = vpack.c.bf16 %v96, %v96
    %v237 = vpack.c.bf16 %v97, %v97
    %v238 = vpack.c.bf16 %v98, %v98
    %v239 = vpack.c.bf16 %v101, %v101
    %v240 = vpack.c.bf16 %v102, %v102
    %v241 = vpack.c.bf16 %v103, %v103
    %v242 = vpack.c.bf16 %v104, %v104
    %v243 = vpack.c.bf16 %v105, %v105
    %v244 = vpack.c.bf16 %v106, %v106
    %v245 = vpack.c.bf16 %v107, %v107
    %v246 = vpack.c.bf16 %v108, %v108
    %v247 = vpack.c.bf16 %v111, %v111
    %v248 = vpack.c.bf16 %v112, %v112
    %v249 = vpack.c.bf16 %v113, %v113
    %v250 = vpack.c.bf16 %v114, %v114
    %v251 = vpack.c.bf16 %v115, %v115
    %v252 = vpack.c.bf16 %v116, %v116
    %v253 = vpack.c.bf16 %v117, %v117
    %v254 = vpack.c.bf16 %v118, %v118
    %v255 = vpack.c.bf16 %v121, %v121
    %v256 = vpack.c.bf16 %v122, %v122
    %v257 = vpack.c.bf16 %v123, %v123
    %v258 = vpack.c.bf16 %v124, %v124
    %v259 = vpack.c.bf16 %v125, %v125
    %v260 = vpack.c.bf16 %v126, %v126
    %v261 = vpack.c.bf16 %v127, %v127
    %v262 = vpack.c.bf16 %v128, %v128
    %v263 = vpack.c.bf16 %v131, %v131
    %v264 = vpack.c.bf16 %v132, %v132
    %v265 = vpack.c.bf16 %v133, %v133
    %v266 = vpack.c.bf16 %v134, %v134
    %v267 = vpack.c.bf16 %v135, %v135
    %v268 = vpack.c.bf16 %v136, %v136
    %v269 = vpack.c.bf16 %v137, %v137
    %v270 = vpack.c.bf16 %v138, %v138
    %v271 = vpack.c.bf16 %v141, %v141
    %v272 = vpack.c.bf16 %v142, %v142
    %v273 = vpack.c.bf16 %v143, %v143
    %v274 = vpack.c.bf16 %v144, %v144
    %v275 = vpack.c.bf16 %v145, %v145
    %v276 = vpack.c.bf16 %v146, %v146
    %v277 = vpack.c.bf16 %v147, %v147
    %v278 = vpack.c.bf16 %v148, %v148
    %v279 = vpack.c.bf16 %v151, %v151
    %v280 = vpack.c.bf16 %v152, %v152
    %v281 = vpack.c.bf16 %v153, %v153
    %v282 = vpack.c.bf16 %v154, %v154
    %v283 = vpack.c.bf16 %v155, %v155
    %v284 = vpack.c.bf16 %v156, %v156
    %v285 = vpack.c.bf16 %v157, %v157
    %v286 = vpack.c.bf16 %v158, %v158
    %v287 = vld [vmem:[#allocation5] sm:$0xff]
    %v288 = vld [vmem:[#allocation5 + $0x8] sm:$0xff]
    %v289 = vld [vmem:[#allocation5 + $0x10] sm:$0xff]
    %v290 = vld [vmem:[#allocation5 + $0x18] sm:$0xff]
    %v291 = vld [vmem:[#allocation5 + $0x20] sm:$0xff]
    %v292 = vld [vmem:[#allocation5 + $0x28] sm:$0xff]
    %v293 = vld [vmem:[#allocation5 + $0x30] sm:$0xff]
    %v294 = vld [vmem:[#allocation5 + $0x38] sm:$0xff]
    %v295 = vld [vmem:[#allocation5 + $0x40] sm:$0xff]
    %v296 = vld [vmem:[#allocation5 + $0x48] sm:$0xff]
    %v297 = vld [vmem:[#allocation5 + $0x50] sm:$0xff]
    %v298 = vld [vmem:[#allocation5 + $0x58] sm:$0xff]
    %v299 = vld [vmem:[#allocation5 + $0x60] sm:$0xff]
    %v300 = vld [vmem:[#allocation5 + $0x68] sm:$0xff]
    %v301 = vld [vmem:[#allocation5 + $0x70] sm:$0xff]
    %v302 = vld [vmem:[#allocation5 + $0x78] sm:$0xff]
    %v303 = vld [vmem:[#allocation5 + $0x80] sm:$0xff]
    %v304 = vld [vmem:[#allocation5 + $0x88] sm:$0xff]
    %v305 = vld [vmem:[#allocation5 + $0x90] sm:$0xff]
    %v306 = vld [vmem:[#allocation5 + $0x98] sm:$0xff]
    %v307 = vld [vmem:[#allocation5 + $0xa0] sm:$0xff]
    %v308 = vld [vmem:[#allocation5 + $0xa8] sm:$0xff]
    %v309 = vld [vmem:[#allocation5 + $0xb0] sm:$0xff]
    %v310 = vld [vmem:[#allocation5 + $0xb8] sm:$0xff]
    %v311 = vld [vmem:[#allocation5 + $0xc0] sm:$0xff]
    %v312 = vld [vmem:[#allocation5 + $0xc8] sm:$0xff]
    %v313 = vld [vmem:[#allocation5 + $0xd0] sm:$0xff]
    %v314 = vld [vmem:[#allocation5 + $0xd8] sm:$0xff]
    %v315 = vld [vmem:[#allocation5 + $0xe0] sm:$0xff]
    %v316 = vld [vmem:[#allocation5 + $0xe8] sm:$0xff]
    %v317 = vld [vmem:[#allocation5 + $0xf0] sm:$0xff]
    %v318 = vld [vmem:[#allocation5 + $0xf8] sm:$0xff]
    %v319 = vld [vmem:[#allocation5 + $0x100] sm:$0xff]
    %v320 = vld [vmem:[#allocation5 + $0x108] sm:$0xff]
    %v321 = vld [vmem:[#allocation5 + $0x110] sm:$0xff]
    %v322 = vld [vmem:[#allocation5 + $0x118] sm:$0xff]
    %v323 = vld [vmem:[#allocation5 + $0x120] sm:$0xff]
    %v324 = vld [vmem:[#allocation5 + $0x128] sm:$0xff]
    %v325 = vld [vmem:[#allocation5 + $0x130] sm:$0xff]
    %v326 = vld [vmem:[#allocation5 + $0x138] sm:$0xff]
    %v327 = vld [vmem:[#allocation5 + $0x140] sm:$0xff]
    %v328 = vld [vmem:[#allocation5 + $0x148] sm:$0xff]
    %v329 = vld [vmem:[#allocation5 + $0x150] sm:$0xff]
    %v330 = vld [vmem:[#allocation5 + $0x158] sm:$0xff]
    %v331 = vld [vmem:[#allocation5 + $0x160] sm:$0xff]
    %v332 = vld [vmem:[#allocation5 + $0x168] sm:$0xff]
    %v333 = vld [vmem:[#allocation5 + $0x170] sm:$0xff]
    %v334 = vld [vmem:[#allocation5 + $0x178] sm:$0xff]
    %v335 = vld [vmem:[#allocation5 + $0x180] sm:$0xff]
    %v336 = vld [vmem:[#allocation5 + $0x188] sm:$0xff]
    %v337 = vld [vmem:[#allocation5 + $0x190] sm:$0xff]
    %v338 = vld [vmem:[#allocation5 + $0x198] sm:$0xff]
    %v339 = vld [vmem:[#allocation5 + $0x1a0] sm:$0xff]
    %v340 = vld [vmem:[#allocation5 + $0x1a8] sm:$0xff]
    %v341 = vld [vmem:[#allocation5 + $0x1b0] sm:$0xff]
    %v342 = vld [vmem:[#allocation5 + $0x1b8] sm:$0xff]
    %v343 = vld [vmem:[#allocation5 + $0x1c0] sm:$0xff]
    %v344 = vld [vmem:[#allocation5 + $0x1c8] sm:$0xff]
    %v345 = vld [vmem:[#allocation5 + $0x1d0] sm:$0xff]
    %v346 = vld [vmem:[#allocation5 + $0x1d8] sm:$0xff]
    %v347 = vld [vmem:[#allocation5 + $0x1e0] sm:$0xff]
    %v348 = vld [vmem:[#allocation5 + $0x1e8] sm:$0xff]
    %v349 = vld [vmem:[#allocation5 + $0x1f0] sm:$0xff]
    %v350 = vld [vmem:[#allocation5 + $0x1f8] sm:$0xff]
    %v351 = vld [vmem:[%s2] sm:$0x1]
    %v353 = vperm.slane %v351, 0
    %v419 = vunpack.c.l.b16 %v287
    %v420 = vunpack.c.h.b16 %v287
    %v421 = vunpack.c.l.b16 %v288
    %v422 = vunpack.c.h.b16 %v288
    %v423 = vunpack.c.l.b16 %v289
    %v424 = vunpack.c.h.b16 %v289
    %v425 = vunpack.c.l.b16 %v290
    %v426 = vunpack.c.h.b16 %v290
    %v427 = vunpack.c.l.b16 %v291
    %v428 = vunpack.c.h.b16 %v291
    %v429 = vunpack.c.l.b16 %v292
    %v430 = vunpack.c.h.b16 %v292
    %v431 = vunpack.c.l.b16 %v293
    %v432 = vunpack.c.h.b16 %v293
    %v433 = vunpack.c.l.b16 %v294
    %v434 = vunpack.c.h.b16 %v294
    %v435 = vunpack.c.l.b16 %v295
    %v436 = vunpack.c.h.b16 %v295
    %v437 = vunpack.c.l.b16 %v296
    %v438 = vunpack.c.h.b16 %v296
    %v439 = vunpack.c.l.b16 %v297
    %v440 = vunpack.c.h.b16 %v297
    %v441 = vunpack.c.l.b16 %v298
    %v442 = vunpack.c.h.b16 %v298
    %v443 = vunpack.c.l.b16 %v299
    %v444 = vunpack.c.h.b16 %v299
    %v445 = vunpack.c.l.b16 %v300
    %v446 = vunpack.c.h.b16 %v300
    %v447 = vunpack.c.l.b16 %v301
    %v448 = vunpack.c.h.b16 %v301
    %v449 = vunpack.c.l.b16 %v302
    %v450 = vunpack.c.h.b16 %v302
    %v451 = vunpack.c.l.b16 %v303
    %v452 = vunpack.c.h.b16 %v303
    %v453 = vunpack.c.l.b16 %v304
    %v454 = vunpack.c.h.b16 %v304
    %v455 = vunpack.c.l.b16 %v305
    %v456 = vunpack.c.h.b16 %v305
    %v457 = vunpack.c.l.b16 %v306
    %v458 = vunpack.c.h.b16 %v306
    %v459 = vunpack.c.l.b16 %v307
    %v460 = vunpack.c.h.b16 %v307
    %v461 = vunpack.c.l.b16 %v308
    %v462 = vunpack.c.h.b16 %v308
    %v463 = vunpack.c.l.b16 %v309
    %v464 = vunpack.c.h.b16 %v309
    %v465 = vunpack.c.l.b16 %v310
    %v466 = vunpack.c.h.b16 %v310
    %v467 = vunpack.c.l.b16 %v311
    %v468 = vunpack.c.h.b16 %v311
    %v469 = vunpack.c.l.b16 %v312
    %v470 = vunpack.c.h.b16 %v312
    %v471 = vunpack.c.l.b16 %v313
    %v472 = vunpack.c.h.b16 %v313
    %v473 = vunpack.c.l.b16 %v314
    %v474 = vunpack.c.h.b16 %v314
    %v475 = vunpack.c.l.b16 %v315
    %v476 = vunpack.c.h.b16 %v315
    %v477 = vunpack.c.l.b16 %v316
    %v478 = vunpack.c.h.b16 %v316
    %v479 = vunpack.c.l.b16 %v317
    %v480 = vunpack.c.h.b16 %v317
    %v481 = vunpack.c.l.b16 %v318
    %v482 = vunpack.c.h.b16 %v318
    %v483 = vunpack.c.l.b16 %v319
    %v484 = vunpack.c.h.b16 %v319
    %v485 = vunpack.c.l.b16 %v320
    %v486 = vunpack.c.h.b16 %v320
    %v487 = vunpack.c.l.b16 %v321
    %v488 = vunpack.c.h.b16 %v321
    %v489 = vunpack.c.l.b16 %v322
    %v490 = vunpack.c.h.b16 %v322
    %v491 = vunpack.c.l.b16 %v323
    %v492 = vunpack.c.h.b16 %v323
    %v493 = vunpack.c.l.b16 %v324
    %v494 = vunpack.c.h.b16 %v324
    %v495 = vunpack.c.l.b16 %v325
    %v496 = vunpack.c.h.b16 %v325
    %v497 = vunpack.c.l.b16 %v326
    %v498 = vunpack.c.h.b16 %v326
    %v499 = vunpack.c.l.b16 %v327
    %v500 = vunpack.c.h.b16 %v327
    %v501 = vunpack.c.l.b16 %v328
    %v502 = vunpack.c.h.b16 %v328
    %v503 = vunpack.c.l.b16 %v329
    %v504 = vunpack.c.h.b16 %v329
    %v505 = vunpack.c.l.b16 %v330
    %v506 = vunpack.c.h.b16 %v330
    %v507 = vunpack.c.l.b16 %v331
    %v508 = vunpack.c.h.b16 %v331
    %v509 = vunpack.c.l.b16 %v332
    %v510 = vunpack.c.h.b16 %v332
    %v511 = vunpack.c.l.b16 %v333
    %v512 = vunpack.c.h.b16 %v333
    %v513 = vunpack.c.l.b16 %v334
    %v514 = vunpack.c.h.b16 %v334
    %v515 = vunpack.c.l.b16 %v335
    %v516 = vunpack.c.h.b16 %v335
    %v517 = vunpack.c.l.b16 %v336
    %v518 = vunpack.c.h.b16 %v336
    %v519 = vunpack.c.l.b16 %v337
    %v520 = vunpack.c.h.b16 %v337
    %v521 = vunpack.c.l.b16 %v338
    %v522 = vunpack.c.h.b16 %v338
    %v523 = vunpack.c.l.b16 %v339
    %v524 = vunpack.c.h.b16 %v339
    %v525 = vunpack.c.l.b16 %v340
    %v526 = vunpack.c.h.b16 %v340
    %v527 = vunpack.c.l.b16 %v341
    %v528 = vunpack.c.h.b16 %v341
    %v529 = vunpack.c.l.b16 %v342
    %v530 = vunpack.c.h.b16 %v342
    %v531 = vunpack.c.l.b16 %v343
    %v532 = vunpack.c.h.b16 %v343
    %v533 = vunpack.c.l.b16 %v344
    %v534 = vunpack.c.h.b16 %v344
    %v535 = vunpack.c.l.b16 %v345
    %v536 = vunpack.c.h.b16 %v345
    %v537 = vunpack.c.l.b16 %v346
    %v538 = vunpack.c.h.b16 %v346
    %v539 = vunpack.c.l.b16 %v347
    %v540 = vunpack.c.h.b16 %v347
    %v541 = vunpack.c.l.b16 %v348
    %v542 = vunpack.c.h.b16 %v348
    %v543 = vunpack.c.l.b16 %v349
    %v544 = vunpack.c.h.b16 %v349
    %v545 = vunpack.c.l.b16 %v350
    %v546 = vunpack.c.h.b16 %v350
    %v547 = vpack.c.b16 %v483, %v419
    %v548 = vpack.c.b16 %v484, %v420
    %v549 = vpack.c.b16 %v485, %v421
    %v550 = vpack.c.b16 %v486, %v422
    %v551 = vpack.c.b16 %v487, %v423
    %v552 = vpack.c.b16 %v488, %v424
    %v553 = vpack.c.b16 %v489, %v425
    %v554 = vpack.c.b16 %v490, %v426
    %v555 = vpack.c.b16 %v491, %v427
    %v556 = vpack.c.b16 %v492, %v428
    %v557 = vpack.c.b16 %v493, %v429
    %v558 = vpack.c.b16 %v494, %v430
    %v559 = vpack.c.b16 %v495, %v431
    %v560 = vpack.c.b16 %v496, %v432
    %v561 = vpack.c.b16 %v497, %v433
    %v562 = vpack.c.b16 %v498, %v434
    %v563 = vpack.c.b16 %v499, %v435
    %v564 = vpack.c.b16 %v500, %v436
    %v565 = vpack.c.b16 %v501, %v437
    %v566 = vpack.c.b16 %v502, %v438
    %v567 = vpack.c.b16 %v503, %v439
    %v568 = vpack.c.b16 %v504, %v440
    %v569 = vpack.c.b16 %v505, %v441
    %v570 = vpack.c.b16 %v506, %v442
    %v571 = vpack.c.b16 %v507, %v443
    %v572 = vpack.c.b16 %v508, %v444
    %v573 = vpack.c.b16 %v509, %v445
    %v574 = vpack.c.b16 %v510, %v446
    %v575 = vpack.c.b16 %v511, %v447
    %v576 = vpack.c.b16 %v512, %v448
    %v577 = vpack.c.b16 %v513, %v449
    %v578 = vpack.c.b16 %v514, %v450
    %v579 = vpack.c.b16 %v515, %v451
    %v580 = vpack.c.b16 %v516, %v452
    %v581 = vpack.c.b16 %v517, %v453
    %v582 = vpack.c.b16 %v518, %v454
    %v583 = vpack.c.b16 %v519, %v455
    %v584 = vpack.c.b16 %v520, %v456
    %v585 = vpack.c.b16 %v521, %v457
    %v586 = vpack.c.b16 %v522, %v458
    %v587 = vpack.c.b16 %v523, %v459
    %v588 = vpack.c.b16 %v524, %v460
    %v589 = vpack.c.b16 %v525, %v461
    %v590 = vpack.c.b16 %v526, %v462
    %v591 = vpack.c.b16 %v527, %v463
    %v592 = vpack.c.b16 %v528, %v464
    %v593 = vpack.c.b16 %v529, %v465
    %v594 = vpack.c.b16 %v530, %v466
    %v595 = vpack.c.b16 %v531, %v467
    %v596 = vpack.c.b16 %v532, %v468
    %v597 = vpack.c.b16 %v533, %v469
    %v598 = vpack.c.b16 %v534, %v470
    %v599 = vpack.c.b16 %v535, %v471
    %v600 = vpack.c.b16 %v536, %v472
    %v601 = vpack.c.b16 %v537, %v473
    %v602 = vpack.c.b16 %v538, %v474
    %v603 = vpack.c.b16 %v539, %v475
    %v604 = vpack.c.b16 %v540, %v476
    %v605 = vpack.c.b16 %v541, %v477
    %v606 = vpack.c.b16 %v542, %v478
    %v607 = vpack.c.b16 %v543, %v479
    %v608 = vpack.c.b16 %v544, %v480
    %v609 = vpack.c.b16 %v545, %v481
    %v610 = vpack.c.b16 %v546, %v482
    %675 = vmatpush.bf16.xpose.msra.mxu0 0
    %676 = vmatpush.bf16.xpose.msra.mxu0 0
    %677 = vmatpush.bf16.xpose.msra.mxu0 0
    %678 = vmatpush.bf16.xpose.msra.mxu0 0
    %679 = vmatpush.bf16.xpose.msra.mxu0 0
    %680 = vmatpush.bf16.xpose.msra.mxu0 0
    %681 = vmatpush.bf16.xpose.msra.mxu0 0
    %682 = vmatpush.bf16.xpose.msra.mxu0 %v547
    %683 = vmatmul.bf16.gmra.mxu0 %v223
    %v684 = vpop.f32.mrf.mxu0
    %v685 = vadd.f32 %v353, %v684
    %v686 = vpop.f32.mrf.mxu0
    %687 = vdwg.mxu0
    %688 = vmatpush.bf16.xpose.msra.mxu0 0
    %689 = vmatpush.bf16.xpose.msra.mxu0 0
    %690 = vmatpush.bf16.xpose.msra.mxu0 0
    %691 = vmatpush.bf16.xpose.msra.mxu0 0
    %692 = vmatpush.bf16.xpose.msra.mxu0 0
    %693 = vmatpush.bf16.xpose.msra.mxu0 0
    %694 = vmatpush.bf16.xpose.msra.mxu0 0
    %695 = vmatpush.bf16.xpose.msra.mxu0 %v548
    %696 = vmatmul.bf16.gmra.mxu0 %v224
    %v697 = vpop.f32.mrf.mxu0
    %v698 = vadd.f32 %v685, %v697
    %v699 = vpop.f32.mrf.mxu0
    %700 = vdwg.mxu0
    %701 = vmatpush.bf16.xpose.msra.mxu0 0
    %702 = vmatpush.bf16.xpose.msra.mxu0 0
    %703 = vmatpush.bf16.xpose.msra.mxu0 0
    %704 = vmatpush.bf16.xpose.msra.mxu0 0
    %705 = vmatpush.bf16.xpose.msra.mxu0 0
    %706 = vmatpush.bf16.xpose.msra.mxu0 0
    %707 = vmatpush.bf16.xpose.msra.mxu0 0
    %708 = vmatpush.bf16.xpose.msra.mxu0 %v549
    %709 = vmatmul.bf16.gmra.mxu0 %v225
    %v710 = vpop.f32.mrf.mxu0
    %v711 = vadd.f32 %v698, %v710
    %v712 = vpop.f32.mrf.mxu0
    %713 = vdwg.mxu0
    %714 = vmatpush.bf16.xpose.msra.mxu0 0
    %715 = vmatpush.bf16.xpose.msra.mxu0 0
    %716 = vmatpush.bf16.xpose.msra.mxu0 0
    %717 = vmatpush.bf16.xpose.msra.mxu0 0
    %718 = vmatpush.bf16.xpose.msra.mxu0 0
    %719 = vmatpush.bf16.xpose.msra.mxu0 0
    %720 = vmatpush.bf16.xpose.msra.mxu0 0
    %721 = vmatpush.bf16.xpose.msra.mxu0 %v550
    %722 = vmatmul.bf16.gmra.mxu0 %v226
    %v723 = vpop.f32.mrf.mxu0
    %v724 = vadd.f32 %v711, %v723
    %v725 = vpop.f32.mrf.mxu0
    %726 = vdwg.mxu0
    %727 = vmatpush.bf16.xpose.msra.mxu0 0
    %728 = vmatpush.bf16.xpose.msra.mxu0 0
    %729 = vmatpush.bf16.xpose.msra.mxu0 0
    %730 = vmatpush.bf16.xpose.msra.mxu0 0
    %731 = vmatpush.bf16.xpose.msra.mxu0 0
    %732 = vmatpush.bf16.xpose.msra.mxu0 0
    %733 = vmatpush.bf16.xpose.msra.mxu0 0
    %734 = vmatpush.bf16.xpose.msra.mxu0 %v551
    %735 = vmatmul.bf16.gmra.mxu0 %v227
    %v736 = vpop.f32.mrf.mxu0
    %v737 = vadd.f32 %v724, %v736
    %v738 = vpop.f32.mrf.mxu0
    %739 = vdwg.mxu0
    %740 = vmatpush.bf16.xpose.msra.mxu0 0
    %741 = vmatpush.bf16.xpose.msra.mxu0 0
    %742 = vmatpush.bf16.xpose.msra.mxu0 0
    %743 = vmatpush.bf16.xpose.msra.mxu0 0
    %744 = vmatpush.bf16.xpose.msra.mxu0 0
    %745 = vmatpush.bf16.xpose.msra.mxu0 0
    %746 = vmatpush.bf16.xpose.msra.mxu0 0
    %747 = vmatpush.bf16.xpose.msra.mxu0 %v552
    %748 = vmatmul.bf16.gmra.mxu0 %v228
    %v749 = vpop.f32.mrf.mxu0
    %v750 = vadd.f32 %v737, %v749
    %v751 = vpop.f32.mrf.mxu0
    %752 = vdwg.mxu0
    %753 = vmatpush.bf16.xpose.msra.mxu0 0
    %754 = vmatpush.bf16.xpose.msra.mxu0 0
    %755 = vmatpush.bf16.xpose.msra.mxu0 0
    %756 = vmatpush.bf16.xpose.msra.mxu0 0
    %757 = vmatpush.bf16.xpose.msra.mxu0 0
    %758 = vmatpush.bf16.xpose.msra.mxu0 0
    %759 = vmatpush.bf16.xpose.msra.mxu0 0
    %760 = vmatpush.bf16.xpose.msra.mxu0 %v553
    %761 = vmatmul.bf16.gmra.mxu0 %v229
    %v762 = vpop.f32.mrf.mxu0
    %v763 = vadd.f32 %v750, %v762
    %v764 = vpop.f32.mrf.mxu0
    %765 = vdwg.mxu0
    %766 = vmatpush.bf16.xpose.msra.mxu0 0
    %767 = vmatpush.bf16.xpose.msra.mxu0 0
    %768 = vmatpush.bf16.xpose.msra.mxu0 0
    %769 = vmatpush.bf16.xpose.msra.mxu0 0
    %770 = vmatpush.bf16.xpose.msra.mxu0 0
    %771 = vmatpush.bf16.xpose.msra.mxu0 0
    %772 = vmatpush.bf16.xpose.msra.mxu0 0
    %773 = vmatpush.bf16.xpose.msra.mxu0 %v554
    %774 = vmatmul.bf16.gmra.mxu0 %v230
    %v775 = vpop.f32.mrf.mxu0
    %v776 = vadd.f32 %v763, %v775
    %v777 = vpop.f32.mrf.mxu0
    %778 = vdwg.mxu0
    %779 = vmatpush.bf16.xpose.msra.mxu0 0
    %780 = vmatpush.bf16.xpose.msra.mxu0 0
    %781 = vmatpush.bf16.xpose.msra.mxu0 0
    %782 = vmatpush.bf16.xpose.msra.mxu0 0
    %783 = vmatpush.bf16.xpose.msra.mxu0 0
    %784 = vmatpush.bf16.xpose.msra.mxu0 0
    %785 = vmatpush.bf16.xpose.msra.mxu0 0
    %786 = vmatpush.bf16.xpose.msra.mxu0 %v555
    %787 = vmatmul.bf16.gmra.mxu0 %v231
    %v788 = vpop.f32.mrf.mxu0
    %v789 = vadd.f32 %v776, %v788
    %v790 = vpop.f32.mrf.mxu0
    %791 = vdwg.mxu0
    %792 = vmatpush.bf16.xpose.msra.mxu0 0
    %793 = vmatpush.bf16.xpose.msra.mxu0 0
    %794 = vmatpush.bf16.xpose.msra.mxu0 0
    %795 = vmatpush.bf16.xpose.msra.mxu0 0
    %796 = vmatpush.bf16.xpose.msra.mxu0 0
    %797 = vmatpush.bf16.xpose.msra.mxu0 0
    %798 = vmatpush.bf16.xpose.msra.mxu0 0
    %799 = vmatpush.bf16.xpose.msra.mxu0 %v556
    %800 = vmatmul.bf16.gmra.mxu0 %v232
    %v801 = vpop.f32.mrf.mxu0
    %v802 = vadd.f32 %v789, %v801
    %v803 = vpop.f32.mrf.mxu0
    %804 = vdwg.mxu0
    %805 = vmatpush.bf16.xpose.msra.mxu0 0
    %806 = vmatpush.bf16.xpose.msra.mxu0 0
    %807 = vmatpush.bf16.xpose.msra.mxu0 0
    %808 = vmatpush.bf16.xpose.msra.mxu0 0
    %809 = vmatpush.bf16.xpose.msra.mxu0 0
    %810 = vmatpush.bf16.xpose.msra.mxu0 0
    %811 = vmatpush.bf16.xpose.msra.mxu0 0
    %812 = vmatpush.bf16.xpose.msra.mxu0 %v557
    %813 = vmatmul.bf16.gmra.mxu0 %v233
    %v814 = vpop.f32.mrf.mxu0
    %v815 = vadd.f32 %v802, %v814
    %v816 = vpop.f32.mrf.mxu0
    %817 = vdwg.mxu0
    %818 = vmatpush.bf16.xpose.msra.mxu0 0
    %819 = vmatpush.bf16.xpose.msra.mxu0 0
    %820 = vmatpush.bf16.xpose.msra.mxu0 0
    %821 = vmatpush.bf16.xpose.msra.mxu0 0
    %822 = vmatpush.bf16.xpose.msra.mxu0 0
    %823 = vmatpush.bf16.xpose.msra.mxu0 0
    %824 = vmatpush.bf16.xpose.msra.mxu0 0
    %825 = vmatpush.bf16.xpose.msra.mxu0 %v558
    %826 = vmatmul.bf16.gmra.mxu0 %v234
    %v827 = vpop.f32.mrf.mxu0
    %v828 = vadd.f32 %v815, %v827
    %v829 = vpop.f32.mrf.mxu0
    %830 = vdwg.mxu0
    %831 = vmatpush.bf16.xpose.msra.mxu0 0
    %832 = vmatpush.bf16.xpose.msra.mxu0 0
    %833 = vmatpush.bf16.xpose.msra.mxu0 0
    %834 = vmatpush.bf16.xpose.msra.mxu0 0
    %835 = vmatpush.bf16.xpose.msra.mxu0 0
    %836 = vmatpush.bf16.xpose.msra.mxu0 0
    %837 = vmatpush.bf16.xpose.msra.mxu0 0
    %838 = vmatpush.bf16.xpose.msra.mxu0 %v559
    %839 = vmatmul.bf16.gmra.mxu0 %v235
    %v840 = vpop.f32.mrf.mxu0
    %v841 = vadd.f32 %v828, %v840
    %v842 = vpop.f32.mrf.mxu0
    %843 = vdwg.mxu0
    %844 = vmatpush.bf16.xpose.msra.mxu0 0
    %845 = vmatpush.bf16.xpose.msra.mxu0 0
    %846 = vmatpush.bf16.xpose.msra.mxu0 0
    %847 = vmatpush.bf16.xpose.msra.mxu0 0
    %848 = vmatpush.bf16.xpose.msra.mxu0 0
    %849 = vmatpush.bf16.xpose.msra.mxu0 0
    %850 = vmatpush.bf16.xpose.msra.mxu0 0
    %851 = vmatpush.bf16.xpose.msra.mxu0 %v560
    %852 = vmatmul.bf16.gmra.mxu0 %v236
    %v853 = vpop.f32.mrf.mxu0
    %v854 = vadd.f32 %v841, %v853
    %v855 = vpop.f32.mrf.mxu0
    %856 = vdwg.mxu0
    %857 = vmatpush.bf16.xpose.msra.mxu0 0
    %858 = vmatpush.bf16.xpose.msra.mxu0 0
    %859 = vmatpush.bf16.xpose.msra.mxu0 0
    %860 = vmatpush.bf16.xpose.msra.mxu0 0
    %861 = vmatpush.bf16.xpose.msra.mxu0 0
    %862 = vmatpush.bf16.xpose.msra.mxu0 0
    %863 = vmatpush.bf16.xpose.msra.mxu0 0
    %864 = vmatpush.bf16.xpose.msra.mxu0 %v561
    %865 = vmatmul.bf16.gmra.mxu0 %v237
    %v866 = vpop.f32.mrf.mxu0
    %v867 = vadd.f32 %v854, %v866
    %v868 = vpop.f32.mrf.mxu0
    %869 = vdwg.mxu0
    %870 = vmatpush.bf16.xpose.msra.mxu0 0
    %871 = vmatpush.bf16.xpose.msra.mxu0 0
    %872 = vmatpush.bf16.xpose.msra.mxu0 0
    %873 = vmatpush.bf16.xpose.msra.mxu0 0
    %874 = vmatpush.bf16.xpose.msra.mxu0 0
    %875 = vmatpush.bf16.xpose.msra.mxu0 0
    %876 = vmatpush.bf16.xpose.msra.mxu0 0
    %877 = vmatpush.bf16.xpose.msra.mxu0 %v562
    %878 = vmatmul.bf16.gmra.mxu0 %v238
    %v879 = vpop.f32.mrf.mxu0
    %v880 = vadd.f32 %v867, %v879
    %v881 = vpop.f32.mrf.mxu0
    %882 = vdwg.mxu0
    %883 = vmatpush.bf16.xpose.msra.mxu0 0
    %884 = vmatpush.bf16.xpose.msra.mxu0 0
    %885 = vmatpush.bf16.xpose.msra.mxu0 0
    %886 = vmatpush.bf16.xpose.msra.mxu0 0
    %887 = vmatpush.bf16.xpose.msra.mxu0 0
    %888 = vmatpush.bf16.xpose.msra.mxu0 0
    %889 = vmatpush.bf16.xpose.msra.mxu0 0
    %890 = vmatpush.bf16.xpose.msra.mxu0 %v563
    %891 = vmatmul.bf16.gmra.mxu0 %v239
    %v892 = vpop.f32.mrf.mxu0
    %v893 = vadd.f32 %v880, %v892
    %v894 = vpop.f32.mrf.mxu0
    %895 = vdwg.mxu0
    %896 = vmatpush.bf16.xpose.msra.mxu0 0
    %897 = vmatpush.bf16.xpose.msra.mxu0 0
    %898 = vmatpush.bf16.xpose.msra.mxu0 0
    %899 = vmatpush.bf16.xpose.msra.mxu0 0
    %900 = vmatpush.bf16.xpose.msra.mxu0 0
    %901 = vmatpush.bf16.xpose.msra.mxu0 0
    %902 = vmatpush.bf16.xpose.msra.mxu0 0
    %903 = vmatpush.bf16.xpose.msra.mxu0 %v564
    %904 = vmatmul.bf16.gmra.mxu0 %v240
    %v905 = vpop.f32.mrf.mxu0
    %v906 = vadd.f32 %v893, %v905
    %v907 = vpop.f32.mrf.mxu0
    %908 = vdwg.mxu0
    %909 = vmatpush.bf16.xpose.msra.mxu0 0
    %910 = vmatpush.bf16.xpose.msra.mxu0 0
    %911 = vmatpush.bf16.xpose.msra.mxu0 0
    %912 = vmatpush.bf16.xpose.msra.mxu0 0
    %913 = vmatpush.bf16.xpose.msra.mxu0 0
    %914 = vmatpush.bf16.xpose.msra.mxu0 0
    %915 = vmatpush.bf16.xpose.msra.mxu0 0
    %916 = vmatpush.bf16.xpose.msra.mxu0 %v565
    %917 = vmatmul.bf16.gmra.mxu0 %v241
    %v918 = vpop.f32.mrf.mxu0
    %v919 = vadd.f32 %v906, %v918
    %v920 = vpop.f32.mrf.mxu0
    %921 = vdwg.mxu0
    %922 = vmatpush.bf16.xpose.msra.mxu0 0
    %923 = vmatpush.bf16.xpose.msra.mxu0 0
    %924 = vmatpush.bf16.xpose.msra.mxu0 0
    %925 = vmatpush.bf16.xpose.msra.mxu0 0
    %926 = vmatpush.bf16.xpose.msra.mxu0 0
    %927 = vmatpush.bf16.xpose.msra.mxu0 0
    %928 = vmatpush.bf16.xpose.msra.mxu0 0
    %929 = vmatpush.bf16.xpose.msra.mxu0 %v566
    %930 = vmatmul.bf16.gmra.mxu0 %v242
    %v931 = vpop.f32.mrf.mxu0
    %v932 = vadd.f32 %v919, %v931
    %v933 = vpop.f32.mrf.mxu0
    %934 = vdwg.mxu0
    %935 = vmatpush.bf16.xpose.msra.mxu0 0
    %936 = vmatpush.bf16.xpose.msra.mxu0 0
    %937 = vmatpush.bf16.xpose.msra.mxu0 0
    %938 = vmatpush.bf16.xpose.msra.mxu0 0
    %939 = vmatpush.bf16.xpose.msra.mxu0 0
    %940 = vmatpush.bf16.xpose.msra.mxu0 0
    %941 = vmatpush.bf16.xpose.msra.mxu0 0
    %942 = vmatpush.bf16.xpose.msra.mxu0 %v567
    %943 = vmatmul.bf16.gmra.mxu0 %v243
    %v944 = vpop.f32.mrf.mxu0
    %v945 = vadd.f32 %v932, %v944
    %v946 = vpop.f32.mrf.mxu0
    %947 = vdwg.mxu0
    %948 = vmatpush.bf16.xpose.msra.mxu0 0
    %949 = vmatpush.bf16.xpose.msra.mxu0 0
    %950 = vmatpush.bf16.xpose.msra.mxu0 0
    %951 = vmatpush.bf16.xpose.msra.mxu0 0
    %952 = vmatpush.bf16.xpose.msra.mxu0 0
    %953 = vmatpush.bf16.xpose.msra.mxu0 0
    %954 = vmatpush.bf16.xpose.msra.mxu0 0
    %955 = vmatpush.bf16.xpose.msra.mxu0 %v568
    %956 = vmatmul.bf16.gmra.mxu0 %v244
    %v957 = vpop.f32.mrf.mxu0
    %v958 = vadd.f32 %v945, %v957
    %v959 = vpop.f32.mrf.mxu0
    %960 = vdwg.mxu0
    %961 = vmatpush.bf16.xpose.msra.mxu0 0
    %962 = vmatpush.bf16.xpose.msra.mxu0 0
    %963 = vmatpush.bf16.xpose.msra.mxu0 0
    %964 = vmatpush.bf16.xpose.msra.mxu0 0
    %965 = vmatpush.bf16.xpose.msra.mxu0 0
    %966 = vmatpush.bf16.xpose.msra.mxu0 0
    %967 = vmatpush.bf16.xpose.msra.mxu0 0
    %968 = vmatpush.bf16.xpose.msra.mxu0 %v569
    %969 = vmatmul.bf16.gmra.mxu0 %v245
    %v970 = vpop.f32.mrf.mxu0
    %v971 = vadd.f32 %v958, %v970
    %v972 = vpop.f32.mrf.mxu0
    %973 = vdwg.mxu0
    %974 = vmatpush.bf16.xpose.msra.mxu0 0
    %975 = vmatpush.bf16.xpose.msra.mxu0 0
    %976 = vmatpush.bf16.xpose.msra.mxu0 0
    %977 = vmatpush.bf16.xpose.msra.mxu0 0
    %978 = vmatpush.bf16.xpose.msra.mxu0 0
    %979 = vmatpush.bf16.xpose.msra.mxu0 0
    %980 = vmatpush.bf16.xpose.msra.mxu0 0
    %981 = vmatpush.bf16.xpose.msra.mxu0 %v570
    %982 = vmatmul.bf16.gmra.mxu0 %v246
    %v983 = vpop.f32.mrf.mxu0
    %v984 = vadd.f32 %v971, %v983
    %v985 = vpop.f32.mrf.mxu0
    %986 = vdwg.mxu0
    %987 = vmatpush.bf16.xpose.msra.mxu0 0
    %988 = vmatpush.bf16.xpose.msra.mxu0 0
    %989 = vmatpush.bf16.xpose.msra.mxu0 0
    %990 = vmatpush.bf16.xpose.msra.mxu0 0
    %991 = vmatpush.bf16.xpose.msra.mxu0 0
    %992 = vmatpush.bf16.xpose.msra.mxu0 0
    %993 = vmatpush.bf16.xpose.msra.mxu0 0
    %994 = vmatpush.bf16.xpose.msra.mxu0 %v571
    %995 = vmatmul.bf16.gmra.mxu0 %v247
    %v996 = vpop.f32.mrf.mxu0
    %v997 = vadd.f32 %v984, %v996
    %v998 = vpop.f32.mrf.mxu0
    %999 = vdwg.mxu0
    %1000 = vmatpush.bf16.xpose.msra.mxu0 0
    %1001 = vmatpush.bf16.xpose.msra.mxu0 0
    %1002 = vmatpush.bf16.xpose.msra.mxu0 0
    %1003 = vmatpush.bf16.xpose.msra.mxu0 0
    %1004 = vmatpush.bf16.xpose.msra.mxu0 0
    %1005 = vmatpush.bf16.xpose.msra.mxu0 0
    %1006 = vmatpush.bf16.xpose.msra.mxu0 0
    %1007 = vmatpush.bf16.xpose.msra.mxu0 %v572
    %1008 = vmatmul.bf16.gmra.mxu0 %v248
    %v1009 = vpop.f32.mrf.mxu0
    %v1010 = vadd.f32 %v997, %v1009
    %v1011 = vpop.f32.mrf.mxu0
    %1012 = vdwg.mxu0
    %1013 = vmatpush.bf16.xpose.msra.mxu0 0
    %1014 = vmatpush.bf16.xpose.msra.mxu0 0
    %1015 = vmatpush.bf16.xpose.msra.mxu0 0
    %1016 = vmatpush.bf16.xpose.msra.mxu0 0
    %1017 = vmatpush.bf16.xpose.msra.mxu0 0
    %1018 = vmatpush.bf16.xpose.msra.mxu0 0
    %1019 = vmatpush.bf16.xpose.msra.mxu0 0
    %1020 = vmatpush.bf16.xpose.msra.mxu0 %v573
    %1021 = vmatmul.bf16.gmra.mxu0 %v249
    %v1022 = vpop.f32.mrf.mxu0
    %v1023 = vadd.f32 %v1010, %v1022
    %v1024 = vpop.f32.mrf.mxu0
    %1025 = vdwg.mxu0
    %1026 = vmatpush.bf16.xpose.msra.mxu0 0
    %1027 = vmatpush.bf16.xpose.msra.mxu0 0
    %1028 = vmatpush.bf16.xpose.msra.mxu0 0
    %1029 = vmatpush.bf16.xpose.msra.mxu0 0
    %1030 = vmatpush.bf16.xpose.msra.mxu0 0
    %1031 = vmatpush.bf16.xpose.msra.mxu0 0
    %1032 = vmatpush.bf16.xpose.msra.mxu0 0
    %1033 = vmatpush.bf16.xpose.msra.mxu0 %v574
    %1034 = vmatmul.bf16.gmra.mxu0 %v250
    %v1035 = vpop.f32.mrf.mxu0
    %v1036 = vadd.f32 %v1023, %v1035
    %v1037 = vpop.f32.mrf.mxu0
    %1038 = vdwg.mxu0
    %1039 = vmatpush.bf16.xpose.msra.mxu0 0
    %1040 = vmatpush.bf16.xpose.msra.mxu0 0
    %1041 = vmatpush.bf16.xpose.msra.mxu0 0
    %1042 = vmatpush.bf16.xpose.msra.mxu0 0
    %1043 = vmatpush.bf16.xpose.msra.mxu0 0
    %1044 = vmatpush.bf16.xpose.msra.mxu0 0
    %1045 = vmatpush.bf16.xpose.msra.mxu0 0
    %1046 = vmatpush.bf16.xpose.msra.mxu0 %v575
    %1047 = vmatmul.bf16.gmra.mxu0 %v251
    %v1048 = vpop.f32.mrf.mxu0
    %v1049 = vadd.f32 %v1036, %v1048
    %v1050 = vpop.f32.mrf.mxu0
    %1051 = vdwg.mxu0
    %1052 = vmatpush.bf16.xpose.msra.mxu0 0
    %1053 = vmatpush.bf16.xpose.msra.mxu0 0
    %1054 = vmatpush.bf16.xpose.msra.mxu0 0
    %1055 = vmatpush.bf16.xpose.msra.mxu0 0
    %1056 = vmatpush.bf16.xpose.msra.mxu0 0
    %1057 = vmatpush.bf16.xpose.msra.mxu0 0
    %1058 = vmatpush.bf16.xpose.msra.mxu0 0
    %1059 = vmatpush.bf16.xpose.msra.mxu0 %v576
    %1060 = vmatmul.bf16.gmra.mxu0 %v252
    %v1061 = vpop.f32.mrf.mxu0
    %v1062 = vadd.f32 %v1049, %v1061
    %v1063 = vpop.f32.mrf.mxu0
    %1064 = vdwg.mxu0
    %1065 = vmatpush.bf16.xpose.msra.mxu0 0
    %1066 = vmatpush.bf16.xpose.msra.mxu0 0
    %1067 = vmatpush.bf16.xpose.msra.mxu0 0
    %1068 = vmatpush.bf16.xpose.msra.mxu0 0
    %1069 = vmatpush.bf16.xpose.msra.mxu0 0
    %1070 = vmatpush.bf16.xpose.msra.mxu0 0
    %1071 = vmatpush.bf16.xpose.msra.mxu0 0
    %1072 = vmatpush.bf16.xpose.msra.mxu0 %v577
    %1073 = vmatmul.bf16.gmra.mxu0 %v253
    %v1074 = vpop.f32.mrf.mxu0
    %v1075 = vadd.f32 %v1062, %v1074
    %v1076 = vpop.f32.mrf.mxu0
    %1077 = vdwg.mxu0
    %1078 = vmatpush.bf16.xpose.msra.mxu0 0
    %1079 = vmatpush.bf16.xpose.msra.mxu0 0
    %1080 = vmatpush.bf16.xpose.msra.mxu0 0
    %1081 = vmatpush.bf16.xpose.msra.mxu0 0
    %1082 = vmatpush.bf16.xpose.msra.mxu0 0
    %1083 = vmatpush.bf16.xpose.msra.mxu0 0
    %1084 = vmatpush.bf16.xpose.msra.mxu0 0
    %1085 = vmatpush.bf16.xpose.msra.mxu0 %v578
    %1086 = vmatmul.bf16.gmra.mxu0 %v254
    %v1087 = vpop.f32.mrf.mxu0
    %v1088 = vadd.f32 %v1075, %v1087
    %v1089 = vpop.f32.mrf.mxu0
    %1090 = vdwg.mxu0
    %1091 = vmatpush.bf16.xpose.msra.mxu0 0
    %1092 = vmatpush.bf16.xpose.msra.mxu0 0
    %1093 = vmatpush.bf16.xpose.msra.mxu0 0
    %1094 = vmatpush.bf16.xpose.msra.mxu0 0
    %1095 = vmatpush.bf16.xpose.msra.mxu0 0
    %1096 = vmatpush.bf16.xpose.msra.mxu0 0
    %1097 = vmatpush.bf16.xpose.msra.mxu0 0
    %1098 = vmatpush.bf16.xpose.msra.mxu0 %v579
    %1099 = vmatmul.bf16.gmra.mxu0 %v255
    %v1100 = vpop.f32.mrf.mxu0
    %v1101 = vadd.f32 %v1088, %v1100
    %v1102 = vpop.f32.mrf.mxu0
    %1103 = vdwg.mxu0
    %1104 = vmatpush.bf16.xpose.msra.mxu0 0
    %1105 = vmatpush.bf16.xpose.msra.mxu0 0
    %1106 = vmatpush.bf16.xpose.msra.mxu0 0
    %1107 = vmatpush.bf16.xpose.msra.mxu0 0
    %1108 = vmatpush.bf16.xpose.msra.mxu0 0
    %1109 = vmatpush.bf16.xpose.msra.mxu0 0
    %1110 = vmatpush.bf16.xpose.msra.mxu0 0
    %1111 = vmatpush.bf16.xpose.msra.mxu0 %v580
    %1112 = vmatmul.bf16.gmra.mxu0 %v256
    %v1113 = vpop.f32.mrf.mxu0
    %v1114 = vadd.f32 %v1101, %v1113
    %v1115 = vpop.f32.mrf.mxu0
    %1116 = vdwg.mxu0
    %1117 = vmatpush.bf16.xpose.msra.mxu0 0
    %1118 = vmatpush.bf16.xpose.msra.mxu0 0
    %1119 = vmatpush.bf16.xpose.msra.mxu0 0
    %1120 = vmatpush.bf16.xpose.msra.mxu0 0
    %1121 = vmatpush.bf16.xpose.msra.mxu0 0
    %1122 = vmatpush.bf16.xpose.msra.mxu0 0
    %1123 = vmatpush.bf16.xpose.msra.mxu0 0
    %1124 = vmatpush.bf16.xpose.msra.mxu0 %v581
    %1125 = vmatmul.bf16.gmra.mxu0 %v257
    %v1126 = vpop.f32.mrf.mxu0
    %v1127 = vadd.f32 %v1114, %v1126
    %v1128 = vpop.f32.mrf.mxu0
    %1129 = vdwg.mxu0
    %1130 = vmatpush.bf16.xpose.msra.mxu0 0
    %1131 = vmatpush.bf16.xpose.msra.mxu0 0
    %1132 = vmatpush.bf16.xpose.msra.mxu0 0
    %1133 = vmatpush.bf16.xpose.msra.mxu0 0
    %1134 = vmatpush.bf16.xpose.msra.mxu0 0
    %1135 = vmatpush.bf16.xpose.msra.mxu0 0
    %1136 = vmatpush.bf16.xpose.msra.mxu0 0
    %1137 = vmatpush.bf16.xpose.msra.mxu0 %v582
    %1138 = vmatmul.bf16.gmra.mxu0 %v258
    %v1139 = vpop.f32.mrf.mxu0
    %v1140 = vadd.f32 %v1127, %v1139
    %v1141 = vpop.f32.mrf.mxu0
    %1142 = vdwg.mxu0
    %1143 = vmatpush.bf16.xpose.msra.mxu0 0
    %1144 = vmatpush.bf16.xpose.msra.mxu0 0
    %1145 = vmatpush.bf16.xpose.msra.mxu0 0
    %1146 = vmatpush.bf16.xpose.msra.mxu0 0
    %1147 = vmatpush.bf16.xpose.msra.mxu0 0
    %1148 = vmatpush.bf16.xpose.msra.mxu0 0
    %1149 = vmatpush.bf16.xpose.msra.mxu0 0
    %1150 = vmatpush.bf16.xpose.msra.mxu0 %v583
    %1151 = vmatmul.bf16.gmra.mxu0 %v259
    %v1152 = vpop.f32.mrf.mxu0
    %v1153 = vadd.f32 %v1140, %v1152
    %v1154 = vpop.f32.mrf.mxu0
    %1155 = vdwg.mxu0
    %1156 = vmatpush.bf16.xpose.msra.mxu0 0
    %1157 = vmatpush.bf16.xpose.msra.mxu0 0
    %1158 = vmatpush.bf16.xpose.msra.mxu0 0
    %1159 = vmatpush.bf16.xpose.msra.mxu0 0
    %1160 = vmatpush.bf16.xpose.msra.mxu0 0
    %1161 = vmatpush.bf16.xpose.msra.mxu0 0
    %1162 = vmatpush.bf16.xpose.msra.mxu0 0
    %1163 = vmatpush.bf16.xpose.msra.mxu0 %v584
    %1164 = vmatmul.bf16.gmra.mxu0 %v260
    %v1165 = vpop.f32.mrf.mxu0
    %v1166 = vadd.f32 %v1153, %v1165
    %v1167 = vpop.f32.mrf.mxu0
    %1168 = vdwg.mxu0
    %1169 = vmatpush.bf16.xpose.msra.mxu0 0
    %1170 = vmatpush.bf16.xpose.msra.mxu0 0
    %1171 = vmatpush.bf16.xpose.msra.mxu0 0
    %1172 = vmatpush.bf16.xpose.msra.mxu0 0
    %1173 = vmatpush.bf16.xpose.msra.mxu0 0
    %1174 = vmatpush.bf16.xpose.msra.mxu0 0
    %1175 = vmatpush.bf16.xpose.msra.mxu0 0
    %1176 = vmatpush.bf16.xpose.msra.mxu0 %v585
    %1177 = vmatmul.bf16.gmra.mxu0 %v261
    %v1178 = vpop.f32.mrf.mxu0
    %v1179 = vadd.f32 %v1166, %v1178
    %v1180 = vpop.f32.mrf.mxu0
    %1181 = vdwg.mxu0
    %1182 = vmatpush.bf16.xpose.msra.mxu0 0
    %1183 = vmatpush.bf16.xpose.msra.mxu0 0
    %1184 = vmatpush.bf16.xpose.msra.mxu0 0
    %1185 = vmatpush.bf16.xpose.msra.mxu0 0
    %1186 = vmatpush.bf16.xpose.msra.mxu0 0
    %1187 = vmatpush.bf16.xpose.msra.mxu0 0
    %1188 = vmatpush.bf16.xpose.msra.mxu0 0
    %1189 = vmatpush.bf16.xpose.msra.mxu0 %v586
    %1190 = vmatmul.bf16.gmra.mxu0 %v262
    %v1191 = vpop.f32.mrf.mxu0
    %v1192 = vadd.f32 %v1179, %v1191
    %v1193 = vpop.f32.mrf.mxu0
    %1194 = vdwg.mxu0
    %1195 = vmatpush.bf16.xpose.msra.mxu0 0
    %1196 = vmatpush.bf16.xpose.msra.mxu0 0
    %1197 = vmatpush.bf16.xpose.msra.mxu0 0
    %1198 = vmatpush.bf16.xpose.msra.mxu0 0
    %1199 = vmatpush.bf16.xpose.msra.mxu0 0
    %1200 = vmatpush.bf16.xpose.msra.mxu0 0
    %1201 = vmatpush.bf16.xpose.msra.mxu0 0
    %1202 = vmatpush.bf16.xpose.msra.mxu0 %v587
    %1203 = vmatmul.bf16.gmra.mxu0 %v263
    %v1204 = vpop.f32.mrf.mxu0
    %v1205 = vadd.f32 %v1192, %v1204
    %v1206 = vpop.f32.mrf.mxu0
    %1207 = vdwg.mxu0
    %1208 = vmatpush.bf16.xpose.msra.mxu0 0
    %1209 = vmatpush.bf16.xpose.msra.mxu0 0
    %1210 = vmatpush.bf16.xpose.msra.mxu0 0
    %1211 = vmatpush.bf16.xpose.msra.mxu0 0
    %1212 = vmatpush.bf16.xpose.msra.mxu0 0
    %1213 = vmatpush.bf16.xpose.msra.mxu0 0
    %1214 = vmatpush.bf16.xpose.msra.mxu0 0
    %1215 = vmatpush.bf16.xpose.msra.mxu0 %v588
    %1216 = vmatmul.bf16.gmra.mxu0 %v264
    %v1217 = vpop.f32.mrf.mxu0
    %v1218 = vadd.f32 %v1205, %v1217
    %v1219 = vpop.f32.mrf.mxu0
    %1220 = vdwg.mxu0
    %1221 = vmatpush.bf16.xpose.msra.mxu0 0
    %1222 = vmatpush.bf16.xpose.msra.mxu0 0
    %1223 = vmatpush.bf16.xpose.msra.mxu0 0
    %1224 = vmatpush.bf16.xpose.msra.mxu0 0
    %1225 = vmatpush.bf16.xpose.msra.mxu0 0
    %1226 = vmatpush.bf16.xpose.msra.mxu0 0
    %1227 = vmatpush.bf16.xpose.msra.mxu0 0
    %1228 = vmatpush.bf16.xpose.msra.mxu0 %v589
    %1229 = vmatmul.bf16.gmra.mxu0 %v265
    %v1230 = vpop.f32.mrf.mxu0
    %v1231 = vadd.f32 %v1218, %v1230
    %v1232 = vpop.f32.mrf.mxu0
    %1233 = vdwg.mxu0
    %1234 = vmatpush.bf16.xpose.msra.mxu0 0
    %1235 = vmatpush.bf16.xpose.msra.mxu0 0
    %1236 = vmatpush.bf16.xpose.msra.mxu0 0
    %1237 = vmatpush.bf16.xpose.msra.mxu0 0
    %1238 = vmatpush.bf16.xpose.msra.mxu0 0
    %1239 = vmatpush.bf16.xpose.msra.mxu0 0
    %1240 = vmatpush.bf16.xpose.msra.mxu0 0
    %1241 = vmatpush.bf16.xpose.msra.mxu0 %v590
    %1242 = vmatmul.bf16.gmra.mxu0 %v266
    %v1243 = vpop.f32.mrf.mxu0
    %v1244 = vadd.f32 %v1231, %v1243
    %v1245 = vpop.f32.mrf.mxu0
    %1246 = vdwg.mxu0
    %1247 = vmatpush.bf16.xpose.msra.mxu0 0
    %1248 = vmatpush.bf16.xpose.msra.mxu0 0
    %1249 = vmatpush.bf16.xpose.msra.mxu0 0
    %1250 = vmatpush.bf16.xpose.msra.mxu0 0
    %1251 = vmatpush.bf16.xpose.msra.mxu0 0
    %1252 = vmatpush.bf16.xpose.msra.mxu0 0
    %1253 = vmatpush.bf16.xpose.msra.mxu0 0
    %1254 = vmatpush.bf16.xpose.msra.mxu0 %v591
    %1255 = vmatmul.bf16.gmra.mxu0 %v267
    %v1256 = vpop.f32.mrf.mxu0
    %v1257 = vadd.f32 %v1244, %v1256
    %v1258 = vpop.f32.mrf.mxu0
    %1259 = vdwg.mxu0
    %1260 = vmatpush.bf16.xpose.msra.mxu0 0
    %1261 = vmatpush.bf16.xpose.msra.mxu0 0
    %1262 = vmatpush.bf16.xpose.msra.mxu0 0
    %1263 = vmatpush.bf16.xpose.msra.mxu0 0
    %1264 = vmatpush.bf16.xpose.msra.mxu0 0
    %1265 = vmatpush.bf16.xpose.msra.mxu0 0
    %1266 = vmatpush.bf16.xpose.msra.mxu0 0
    %1267 = vmatpush.bf16.xpose.msra.mxu0 %v592
    %1268 = vmatmul.bf16.gmra.mxu0 %v268
    %v1269 = vpop.f32.mrf.mxu0
    %v1270 = vadd.f32 %v1257, %v1269
    %v1271 = vpop.f32.mrf.mxu0
    %1272 = vdwg.mxu0
    %1273 = vmatpush.bf16.xpose.msra.mxu0 0
    %1274 = vmatpush.bf16.xpose.msra.mxu0 0
    %1275 = vmatpush.bf16.xpose.msra.mxu0 0
    %1276 = vmatpush.bf16.xpose.msra.mxu0 0
    %1277 = vmatpush.bf16.xpose.msra.mxu0 0
    %1278 = vmatpush.bf16.xpose.msra.mxu0 0
    %1279 = vmatpush.bf16.xpose.msra.mxu0 0
    %1280 = vmatpush.bf16.xpose.msra.mxu0 %v593
    %1281 = vmatmul.bf16.gmra.mxu0 %v269
    %v1282 = vpop.f32.mrf.mxu0
    %v1283 = vadd.f32 %v1270, %v1282
    %v1284 = vpop.f32.mrf.mxu0
    %1285 = vdwg.mxu0
    %1286 = vmatpush.bf16.xpose.msra.mxu0 0
    %1287 = vmatpush.bf16.xpose.msra.mxu0 0
    %1288 = vmatpush.bf16.xpose.msra.mxu0 0
    %1289 = vmatpush.bf16.xpose.msra.mxu0 0
    %1290 = vmatpush.bf16.xpose.msra.mxu0 0
    %1291 = vmatpush.bf16.xpose.msra.mxu0 0
    %1292 = vmatpush.bf16.xpose.msra.mxu0 0
    %1293 = vmatpush.bf16.xpose.msra.mxu0 %v594
    %1294 = vmatmul.bf16.gmra.mxu0 %v270
    %v1295 = vpop.f32.mrf.mxu0
    %v1296 = vadd.f32 %v1283, %v1295
    %v1297 = vpop.f32.mrf.mxu0
    %1298 = vdwg.mxu0
    %1299 = vmatpush.bf16.xpose.msra.mxu0 0
    %1300 = vmatpush.bf16.xpose.msra.mxu0 0
    %1301 = vmatpush.bf16.xpose.msra.mxu0 0
    %1302 = vmatpush.bf16.xpose.msra.mxu0 0
    %1303 = vmatpush.bf16.xpose.msra.mxu0 0
    %1304 = vmatpush.bf16.xpose.msra.mxu0 0
    %1305 = vmatpush.bf16.xpose.msra.mxu0 0
    %1306 = vmatpush.bf16.xpose.msra.mxu0 %v595
    %1307 = vmatmul.bf16.gmra.mxu0 %v271
    %v1308 = vpop.f32.mrf.mxu0
    %v1309 = vadd.f32 %v1296, %v1308
    %v1310 = vpop.f32.mrf.mxu0
    %1311 = vdwg.mxu0
    %1312 = vmatpush.bf16.xpose.msra.mxu0 0
    %1313 = vmatpush.bf16.xpose.msra.mxu0 0
    %1314 = vmatpush.bf16.xpose.msra.mxu0 0
    %1315 = vmatpush.bf16.xpose.msra.mxu0 0
    %1316 = vmatpush.bf16.xpose.msra.mxu0 0
    %1317 = vmatpush.bf16.xpose.msra.mxu0 0
    %1318 = vmatpush.bf16.xpose.msra.mxu0 0
    %1319 = vmatpush.bf16.xpose.msra.mxu0 %v596
    %1320 = vmatmul.bf16.gmra.mxu0 %v272
    %v1321 = vpop.f32.mrf.mxu0
    %v1322 = vadd.f32 %v1309, %v1321
    %v1323 = vpop.f32.mrf.mxu0
    %1324 = vdwg.mxu0
    %1325 = vmatpush.bf16.xpose.msra.mxu0 0
    %1326 = vmatpush.bf16.xpose.msra.mxu0 0
    %1327 = vmatpush.bf16.xpose.msra.mxu0 0
    %1328 = vmatpush.bf16.xpose.msra.mxu0 0
    %1329 = vmatpush.bf16.xpose.msra.mxu0 0
    %1330 = vmatpush.bf16.xpose.msra.mxu0 0
    %1331 = vmatpush.bf16.xpose.msra.mxu0 0
    %1332 = vmatpush.bf16.xpose.msra.mxu0 %v597
    %1333 = vmatmul.bf16.gmra.mxu0 %v273
    %v1334 = vpop.f32.mrf.mxu0
    %v1335 = vadd.f32 %v1322, %v1334
    %v1336 = vpop.f32.mrf.mxu0
    %1337 = vdwg.mxu0
    %1338 = vmatpush.bf16.xpose.msra.mxu0 0
    %1339 = vmatpush.bf16.xpose.msra.mxu0 0
    %1340 = vmatpush.bf16.xpose.msra.mxu0 0
    %1341 = vmatpush.bf16.xpose.msra.mxu0 0
    %1342 = vmatpush.bf16.xpose.msra.mxu0 0
    %1343 = vmatpush.bf16.xpose.msra.mxu0 0
    %1344 = vmatpush.bf16.xpose.msra.mxu0 0
    %1345 = vmatpush.bf16.xpose.msra.mxu0 %v598
    %1346 = vmatmul.bf16.gmra.mxu0 %v274
    %v1347 = vpop.f32.mrf.mxu0
    %v1348 = vadd.f32 %v1335, %v1347
    %v1349 = vpop.f32.mrf.mxu0
    %1350 = vdwg.mxu0
    %1351 = vmatpush.bf16.xpose.msra.mxu0 0
    %1352 = vmatpush.bf16.xpose.msra.mxu0 0
    %1353 = vmatpush.bf16.xpose.msra.mxu0 0
    %1354 = vmatpush.bf16.xpose.msra.mxu0 0
    %1355 = vmatpush.bf16.xpose.msra.mxu0 0
    %1356 = vmatpush.bf16.xpose.msra.mxu0 0
    %1357 = vmatpush.bf16.xpose.msra.mxu0 0
    %1358 = vmatpush.bf16.xpose.msra.mxu0 %v599
    %1359 = vmatmul.bf16.gmra.mxu0 %v275
    %v1360 = vpop.f32.mrf.mxu0
    %v1361 = vadd.f32 %v1348, %v1360
    %v1362 = vpop.f32.mrf.mxu0
    %1363 = vdwg.mxu0
    %1364 = vmatpush.bf16.xpose.msra.mxu0 0
    %1365 = vmatpush.bf16.xpose.msra.mxu0 0
    %1366 = vmatpush.bf16.xpose.msra.mxu0 0
    %1367 = vmatpush.bf16.xpose.msra.mxu0 0
    %1368 = vmatpush.bf16.xpose.msra.mxu0 0
    %1369 = vmatpush.bf16.xpose.msra.mxu0 0
    %1370 = vmatpush.bf16.xpose.msra.mxu0 0
    %1371 = vmatpush.bf16.xpose.msra.mxu0 %v600
    %1372 = vmatmul.bf16.gmra.mxu0 %v276
    %v1373 = vpop.f32.mrf.mxu0
    %v1374 = vadd.f32 %v1361, %v1373
    %v1375 = vpop.f32.mrf.mxu0
    %1376 = vdwg.mxu0
    %1377 = vmatpush.bf16.xpose.msra.mxu0 0
    %1378 = vmatpush.bf16.xpose.msra.mxu0 0
    %1379 = vmatpush.bf16.xpose.msra.mxu0 0
    %1380 = vmatpush.bf16.xpose.msra.mxu0 0
    %1381 = vmatpush.bf16.xpose.msra.mxu0 0
    %1382 = vmatpush.bf16.xpose.msra.mxu0 0
    %1383 = vmatpush.bf16.xpose.msra.mxu0 0
    %1384 = vmatpush.bf16.xpose.msra.mxu0 %v601
    %1385 = vmatmul.bf16.gmra.mxu0 %v277
    %v1386 = vpop.f32.mrf.mxu0
    %v1387 = vadd.f32 %v1374, %v1386
    %v1388 = vpop.f32.mrf.mxu0
    %1389 = vdwg.mxu0
    %1390 = vmatpush.bf16.xpose.msra.mxu0 0
    %1391 = vmatpush.bf16.xpose.msra.mxu0 0
    %1392 = vmatpush.bf16.xpose.msra.mxu0 0
    %1393 = vmatpush.bf16.xpose.msra.mxu0 0
    %1394 = vmatpush.bf16.xpose.msra.mxu0 0
    %1395 = vmatpush.bf16.xpose.msra.mxu0 0
    %1396 = vmatpush.bf16.xpose.msra.mxu0 0
    %1397 = vmatpush.bf16.xpose.msra.mxu0 %v602
    %1398 = vmatmul.bf16.gmra.mxu0 %v278
    %v1399 = vpop.f32.mrf.mxu0
    %v1400 = vadd.f32 %v1387, %v1399
    %v1401 = vpop.f32.mrf.mxu0
    %1402 = vdwg.mxu0
    %1403 = vmatpush.bf16.xpose.msra.mxu0 0
    %1404 = vmatpush.bf16.xpose.msra.mxu0 0
    %1405 = vmatpush.bf16.xpose.msra.mxu0 0
    %1406 = vmatpush.bf16.xpose.msra.mxu0 0
    %1407 = vmatpush.bf16.xpose.msra.mxu0 0
    %1408 = vmatpush.bf16.xpose.msra.mxu0 0
    %1409 = vmatpush.bf16.xpose.msra.mxu0 0
    %1410 = vmatpush.bf16.xpose.msra.mxu0 %v603
    %1411 = vmatmul.bf16.gmra.mxu0 %v279
    %v1412 = vpop.f32.mrf.mxu0
    %v1413 = vadd.f32 %v1400, %v1412
    %v1414 = vpop.f32.mrf.mxu0
    %1415 = vdwg.mxu0
    %1416 = vmatpush.bf16.xpose.msra.mxu0 0
    %1417 = vmatpush.bf16.xpose.msra.mxu0 0
    %1418 = vmatpush.bf16.xpose.msra.mxu0 0
    %1419 = vmatpush.bf16.xpose.msra.mxu0 0
    %1420 = vmatpush.bf16.xpose.msra.mxu0 0
    %1421 = vmatpush.bf16.xpose.msra.mxu0 0
    %1422 = vmatpush.bf16.xpose.msra.mxu0 0
    %1423 = vmatpush.bf16.xpose.msra.mxu0 %v604
    %1424 = vmatmul.bf16.gmra.mxu0 %v280
    %v1425 = vpop.f32.mrf.mxu0
    %v1426 = vadd.f32 %v1413, %v1425
    %v1427 = vpop.f32.mrf.mxu0
    %1428 = vdwg.mxu0
    %1429 = vmatpush.bf16.xpose.msra.mxu0 0
    %1430 = vmatpush.bf16.xpose.msra.mxu0 0
    %1431 = vmatpush.bf16.xpose.msra.mxu0 0
    %1432 = vmatpush.bf16.xpose.msra.mxu0 0
    %1433 = vmatpush.bf16.xpose.msra.mxu0 0
    %1434 = vmatpush.bf16.xpose.msra.mxu0 0
    %1435 = vmatpush.bf16.xpose.msra.mxu0 0
    %1436 = vmatpush.bf16.xpose.msra.mxu0 %v605
    %1437 = vmatmul.bf16.gmra.mxu0 %v281
    %v1438 = vpop.f32.mrf.mxu0
    %v1439 = vadd.f32 %v1426, %v1438
    %v1440 = vpop.f32.mrf.mxu0
    %1441 = vdwg.mxu0
    %1442 = vmatpush.bf16.xpose.msra.mxu0 0
    %1443 = vmatpush.bf16.xpose.msra.mxu0 0
    %1444 = vmatpush.bf16.xpose.msra.mxu0 0
    %1445 = vmatpush.bf16.xpose.msra.mxu0 0
    %1446 = vmatpush.bf16.xpose.msra.mxu0 0
    %1447 = vmatpush.bf16.xpose.msra.mxu0 0
    %1448 = vmatpush.bf16.xpose.msra.mxu0 0
    %1449 = vmatpush.bf16.xpose.msra.mxu0 %v606
    %1450 = vmatmul.bf16.gmra.mxu0 %v282
    %v1451 = vpop.f32.mrf.mxu0
    %v1452 = vadd.f32 %v1439, %v1451
    %v1453 = vpop.f32.mrf.mxu0
    %1454 = vdwg.mxu0
    %1455 = vmatpush.bf16.xpose.msra.mxu0 0
    %1456 = vmatpush.bf16.xpose.msra.mxu0 0
    %1457 = vmatpush.bf16.xpose.msra.mxu0 0
    %1458 = vmatpush.bf16.xpose.msra.mxu0 0
    %1459 = vmatpush.bf16.xpose.msra.mxu0 0
    %1460 = vmatpush.bf16.xpose.msra.mxu0 0
    %1461 = vmatpush.bf16.xpose.msra.mxu0 0
    %1462 = vmatpush.bf16.xpose.msra.mxu0 %v607
    %1463 = vmatmul.bf16.gmra.mxu0 %v283
    %v1464 = vpop.f32.mrf.mxu0
    %v1465 = vadd.f32 %v1452, %v1464
    %v1466 = vpop.f32.mrf.mxu0
    %1467 = vdwg.mxu0
    %1468 = vmatpush.bf16.xpose.msra.mxu0 0
    %1469 = vmatpush.bf16.xpose.msra.mxu0 0
    %1470 = vmatpush.bf16.xpose.msra.mxu0 0
    %1471 = vmatpush.bf16.xpose.msra.mxu0 0
    %1472 = vmatpush.bf16.xpose.msra.mxu0 0
    %1473 = vmatpush.bf16.xpose.msra.mxu0 0
    %1474 = vmatpush.bf16.xpose.msra.mxu0 0
    %1475 = vmatpush.bf16.xpose.msra.mxu0 %v608
    %1476 = vmatmul.bf16.gmra.mxu0 %v284
    %v1477 = vpop.f32.mrf.mxu0
    %v1478 = vadd.f32 %v1465, %v1477
    %v1479 = vpop.f32.mrf.mxu0
    %1480 = vdwg.mxu0
    %1481 = vmatpush.bf16.xpose.msra.mxu0 0
    %1482 = vmatpush.bf16.xpose.msra.mxu0 0
    %1483 = vmatpush.bf16.xpose.msra.mxu0 0
    %1484 = vmatpush.bf16.xpose.msra.mxu0 0
    %1485 = vmatpush.bf16.xpose.msra.mxu0 0
    %1486 = vmatpush.bf16.xpose.msra.mxu0 0
    %1487 = vmatpush.bf16.xpose.msra.mxu0 0
    %1488 = vmatpush.bf16.xpose.msra.mxu0 %v609
    %1489 = vmatmul.bf16.gmra.mxu0 %v285
    %v1490 = vpop.f32.mrf.mxu0
    %v1491 = vadd.f32 %v1478, %v1490
    %v1492 = vpop.f32.mrf.mxu0
    %1493 = vdwg.mxu0
    %1494 = vmatpush.bf16.xpose.msra.mxu0 0
    %1495 = vmatpush.bf16.xpose.msra.mxu0 0
    %1496 = vmatpush.bf16.xpose.msra.mxu0 0
    %1497 = vmatpush.bf16.xpose.msra.mxu0 0
    %1498 = vmatpush.bf16.xpose.msra.mxu0 0
    %1499 = vmatpush.bf16.xpose.msra.mxu0 0
    %1500 = vmatpush.bf16.xpose.msra.mxu0 0
    %1501 = vmatpush.bf16.xpose.msra.mxu0 %v610
    %1502 = vmatmul.bf16.gmra.mxu0 %v286
    %v1503 = vpop.f32.mrf.mxu0
    %v1504 = vadd.f32 %v1491, %v1503
    %v1505 = vpop.f32.mrf.mxu0
    %1506 = vdwg.mxu0
    %v1507 = vlaneseq
    %v1508 = vand.u32 %v1507, 127
    %vm1509 = vcmp.ge.s32.totalorder %v1508, 12
    %vm1510 = vcmp.lt.s32.totalorder %v1508, 14
    %vm1511 = vmand %vm1509, %vm1510
    %v1512 = vmul.f32 %v1504, 1.442695
    %v1513 = vpow.pop %v1512
    %v1514 = vsel %vm1511, %v1513, %v1504
    %vm1515 = vcmask 123904
    %1516 = vst.msk [vmem:[#allocation7] sm:$0x3] %vm1515, %v1514
    // Predicated region
    $region22: #{tpu_custom_call.1} parent=1 // pred_check
      _
    $region23: #{tpu_custom_call.1} parent=1 // pred_check_branch
      %1518 = sbr.rel (0) target = $region25
    $region24: #{tpu_custom_call.1} parent=1 // pred_region
      %1520 = vsyncadd [#allocation4], 0
      %s1522 = sshll.u32 [#allocation7], 4
      %s1523 = int_to_ptr.vmem [resolvable:$true] %s1522
      %s1524 = sshll.u32 %s3, 4
      %s1525 = int_to_ptr.hbm [resolvable:$true] %s1524
      %1527 = dma.vmem_to_hbm [thread:$0]  %s1523, 32, %s1525, [#allocation4]
    $region25: #{tpu_custom_call.1} parent=1 // pred_fallthru
      _
    // Predicated region
    $region26: #{tpu_custom_call.1} parent=1 // pred_check
      _
    $region27: #{tpu_custom_call.1} parent=1 // pred_check_branch
      %1529 = sbr.rel (0) target = $region29
    $region28: #{tpu_custom_call.1} parent=1 // pred_region
      %1531 = dma.done [#allocation4], 32
    $region29: #{tpu_custom_call.1} parent=1 // pred_fallthru
      _
    %1532 = vsyncpa [#allocation3], 1
    %1533 = vsyncpa [#allocation6], 1
    %1534 = vsyncpa [#allocation4], 1

</llo_original>
